<compile_context>
chip_gen: v7x
topology: tpu7x:2x2x1
jax: 0.10.0
libtpu: 0.0.40
codegen_flags: <defaults>
</compile_context>

<pallas_src>
import jax
import jax.numpy as jnp
from jax import lax
from jax.experimental import pallas as pl
from jax.experimental.pallas import tpu as pltpu

EPS = 1e-5  # nn.InstanceNorm2d default eps


def _pick_row_tile(ho):
    if ho > 16 and ho % 16 == 0:
        return 16
    if ho % 8 == 0:
        return 8
    return ho  # fallback: whole image (block dim equals full extent)


def _make_kernel(cin, cout, ho, wo, tr, n_row_tiles):
    inv_s = 1.0 / float(ho * wo)

    def kernel(planes_ref, w_ref, o_ref, conv_ref, sums_ref):
        # planes_ref: (1, 1, TR+1, 4*Cin, Wo+1)  parity-plane row-tile (+1 halo row)
        # w_ref:      (9, Cout, Cin)             conv taps, tap index = kh*3 + kw
        # o_ref:      (1, Cout, TR, Wo)          output row-tile (written in phase 2)
        # conv_ref:   VMEM (Cout, Ho, Wo) f32    conv output of the current image
        # sums_ref:   VMEM (2, Cout, 1) f32      per-channel [sum, sum-of-squares]
        t = pl.program_id(1)

        @pl.when(t < n_row_tiles)
        def _conv_phase():
            @pl.when(t == 0)
            def _():
                sums_ref[...] = jnp.zeros_like(sums_ref)

            def row_body(i, carry):
                acc = jnp.zeros((cout, wo), jnp.float32)
                for kh in range(3):
                    for kw in range(3):
                        p = (kh % 2) * 2 + (kw % 2)   # which parity plane
                        di, dj = kh // 2, kw // 2     # +0/+1 shift within the plane
                        xs = planes_ref[0, 0, pl.ds(i + di, 1),
                                        pl.ds(p * cin, cin), pl.ds(dj, wo)]  # (1,Cin,Wo)
                        w_tap = w_ref[kh * 3 + kw]                           # (Cout,Cin)
                        acc = acc + jnp.dot(w_tap, xs[0],
                                            preferred_element_type=jnp.float32)
                row = t * tr + i
                conv_ref[:, pl.ds(row, 1), :] = acc.reshape(cout, 1, wo)
                sums_ref[0] = sums_ref[0] + jnp.sum(acc, axis=1, keepdims=True)
                sums_ref[1] = sums_ref[1] + jnp.sum(acc * acc, axis=1, keepdims=True)
                return carry

            lax.fori_loop(0, tr, row_body, 0)

        @pl.when(t >= n_row_tiles)
        def _norm_phase():
            mean = sums_ref[0] * inv_s                       # (Cout, 1)
            var = sums_ref[1] * inv_s - mean * mean          # biased variance
            rstd = lax.rsqrt(var + EPS)
            row0 = pl.multiple_of((t - n_row_tiles) * tr, tr)
            tile = conv_ref[:, pl.ds(row0, tr), :]           # (Cout, TR, Wo)
            y = (tile - mean.reshape(cout, 1, 1)) * rstd.reshape(cout, 1, 1)
            o_ref[0] = jnp.maximum(y, 0.0).astype(o_ref.dtype)

    return kernel


def downsampling_block(x, weight, bias=None):
    """x: (N, Cin, H, W) f32 (H, W even). weight: (Cout, Cin, 3, 3). bias: (Cout,)."""
    del bias  # algebraically cancelled by InstanceNorm2d's mean subtraction
    n, cin, h, w = x.shape
    cout = weight.shape[0]
    assert h % 2 == 0 and w % 2 == 0, "even spatial sizes expected"
    # TODO(synk): odd H/W would need uneven parity-plane handling (not implemented).
    ho, wo = h // 2, w // 2
    wq = wo + 1
    tr = _pick_row_tile(ho)
    n_row_tiles = ho // tr

    # ---- XLA-side layout prep (reads x once, writes ~1.06x input bytes) ----
    xp = jnp.pad(x, ((0, 0), (0, 0), (1, 1), (1, 1)), mode="reflect")  # (N,Cin,H+2,W+2)
    xp = xp.transpose(0, 2, 1, 3)                                      # (N,H+2,Cin,W+2)
    # stride-2 parity planes; plane p = r*2 + c holds xp[:, r::2, :, c::2]
    planes = jnp.stack([xp[:, r::2, :, c::2] for r in (0, 1) for c in (0, 1)],
                       axis=2)                                         # (N,Ho+1,4,Cin,Wo+1)
    planes = planes.reshape(n, ho + 1, 4 * cin, wq)
    # row-tiles of TR+1 plane rows (one halo row shared with the next tile)
    tiles = jnp.stack([planes[:, r * tr: r * tr + tr + 1]
                       for r in range(n_row_tiles)], axis=1)           # (N,nR,TR+1,4Cin,Wq)
    # conv taps, tap index = kh*3 + kw
    w_taps = jnp.stack([weight[:, :, kh, kw]
                        for kh in range(3) for kw in range(3)], axis=0)  # (9,Cout,Cin)

    kernel = _make_kernel(cin, cout, ho, wo, tr, n_row_tiles)
    out = pl.pallas_call(
        kernel,
        out_shape=jax.ShapeDtypeStruct((n, cout, ho, wo), x.dtype),
        grid=(n, 2 * n_row_tiles),
        in_specs=[
            pl.BlockSpec((1, 1, tr + 1, 4 * cin, wq),
                         lambda b, t: (b, jnp.minimum(t, n_row_tiles - 1), 0, 0, 0)),
            pl.BlockSpec((9, cout, cin), lambda b, t: (0, 0, 0)),
        ],
        out_specs=pl.BlockSpec((1, cout, tr, wo),
                               lambda b, t: (b, 0, jnp.maximum(t - n_row_tiles, 0), 0)),
        scratch_shapes=[
            pltpu.VMEM((cout, ho, wo), jnp.float32),  # conv output of current image
            pltpu.VMEM((2, cout, 1), jnp.float32),    # per-channel sum / sum-of-squares
        ],
        compiler_params=pltpu.CompilerParams(
            dimension_semantics=("parallel", "arbitrary")),
    )(tiles, w_taps)
    return out


def _reference(x, weight, bias):
    xp = jnp.pad(x, ((0, 0), (0, 0), (1, 1), (1, 1)), mode="reflect")
    y = lax.conv_general_dilated(
        xp, weight, window_strides=(2, 2), padding="VALID",
        dimension_numbers=("NCHW", "OIHW", "NCHW"))
    y = y + bias.reshape(1, -1, 1, 1)
    mean = jnp.mean(y, axis=(2, 3), keepdims=True)
    var = jnp.mean((y - mean) ** 2, axis=(2, 3), keepdims=True)
    return jnp.maximum((y - mean) * lax.rsqrt(var + EPS), 0.0)


if __name__ == "__main__":
    key = jax.random.PRNGKey(0)
    for (n, cin, h, w, cout) in [(2, 4, 16, 16, 8),    # single row-tile per image
                                 (2, 4, 32, 32, 8)]:   # two row-tiles per image
        k_x, k_w, k_b = jax.random.split(jax.random.fold_in(key, h), 3)
        x = jax.random.normal(k_x, (n, cin, h, w), dtype=jnp.float32)
        fan_in = cin * 9
        bound = 1.0 / (fan_in ** 0.5)
        weight = jax.random.uniform(k_w, (cout, cin, 3, 3), jnp.float32, -bound, bound)
        bias = jax.random.uniform(k_b, (cout,), jnp.float32, -bound, bound)

        out = jax.block_until_ready(downsampling_block(x, weight, bias))
        ref = _reference(x, weight, bias)
        assert out.shape == (n, cout, h // 2, w // 2), out.shape
        err = float(jnp.max(jnp.abs(out - ref)))
        assert err < 1e-4, err
    print("KERNEL_OK")
</pallas_src>

<mosaic_0001>
module attributes {stable_mosaic.version = 11 : i64} {
  func.func @kernel(%arg0: i32, %arg1: i32, %arg2: memref<1x1x9x16x9xf32, #tpu.memory_space<vmem>>, %arg3: memref<9x8x4xf32, #tpu.memory_space<vmem>>, %arg4: memref<1x8x8x8xf32, #tpu.memory_space<vmem>>, %arg5: memref<8x8x8xf32, #tpu.memory_space<vmem>>, %arg6: memref<2x8x1xf32, #tpu.memory_space<vmem>>) attributes {dimension_semantics = [#tpu.dimension_semantics<parallel>, #tpu.dimension_semantics<arbitrary>], iteration_bounds = array<i64: 2, 2>, scalar_prefetch = 0 : i64, scratch_operands = 2 : i64, tpu.core_type = #tpu.core_type<tc>, window_params = [{transform_indices = @transform_0, window_bounds = array<i64: 1, 1, 9, 16, 9>}, {pipeline_mode = #tpu.pipeline_mode<synchronous>, transform_indices = @transform_1, window_bounds = array<i64: 9, 8, 4>}, {transform_indices = @transform_2, window_bounds = array<i64: 1, 8, 8, 8>}]} {
    %c1_i32 = arith.constant 1 : i32
    %0 = arith.cmpi slt, %arg1, %c1_i32 : i32
    %1 = arith.extui %0 : i1 to i32
    %c0_i32 = arith.constant 0 : i32
    %2 = arith.cmpi ne, %1, %c0_i32 : i32
    scf.if %2 {
      %c0_i32_2 = arith.constant 0 : i32
      %6 = arith.cmpi eq, %arg1, %c0_i32_2 : i32
      %7 = arith.extui %6 : i1 to i32
      %c0_i32_3 = arith.constant 0 : i32
      %8 = arith.cmpi ne, %7, %c0_i32_3 : i32
      scf.if %8 {
        %cst = arith.constant 0.000000e+00 : f32
        %10 = vector.broadcast %cst : f32 to vector<2x8x1xf32>
        %c0 = arith.constant 0 : index
        %c0_7 = arith.constant 0 : index
        %c0_8 = arith.constant 0 : index
        %11 = vector.load %arg6[%c0, %c0_7, %c0_8] : memref<2x8x1xf32, #tpu.memory_space<vmem>>, vector<2x8x1xf32>
        tpu.vector_store %arg6[%c0, %c0_7, %c0_8], %10 {strides = array<i32>} : memref<2x8x1xf32, #tpu.memory_space<vmem>>, vector<2x8x1xf32>,
      } else {
      }
      %c0_i32_4 = arith.constant 0 : i32
      %c8_i32 = arith.constant 8 : i32
      %9 = arith.addi %c0_i32_4, %c8_i32 : i32
      %c1_i32_5 = arith.constant 1 : i32
      scf.for %arg7 = %c0_i32_4 to %9 step %c1_i32_5  : i32 {
        %cst = arith.constant 0.000000e+00 : f32
        %10 = vector.broadcast %cst : f32 to vector<8x8xf32>
        %c0_i32_7 = arith.constant 0 : i32
        %11 = arith.addi %arg7, %c0_i32_7 : i32
        %c0 = arith.constant 0 : index
        %c0_8 = arith.constant 0 : index
        %12 = arith.index_cast %11 : i32 to index
        %c0_9 = arith.constant 0 : index
        %c0_10 = arith.constant 0 : index
        %13 = vector.load %arg2[%c0, %c0_8, %12, %c0_9, %c0_10] : memref<1x1x9x16x9xf32, #tpu.memory_space<vmem>>, vector<1x1x1x4x8xf32>
        %14 = vector.shape_cast %13 : vector<1x1x1x4x8xf32> to vector<1x4x8xf32>
        %c0_11 = arith.constant 0 : index
        %c0_12 = arith.constant 0 : index
        %c0_13 = arith.constant 0 : index
        %15 = vector.load %arg3[%c0_11, %c0_12, %c0_13] : memref<9x8x4xf32, #tpu.memory_space<vmem>>, vector<1x8x4xf32>
        %16 = vector.shape_cast %15 : vector<1x8x4xf32> to vector<8x4xf32>
        %17 = vector.shape_cast %14 : vector<1x4x8xf32> to vector<4x8xf32>
        %cst_14 = arith.constant dense<0.000000e+00> : vector<8x8xf32>
        %18 = tpu.matmul %16, %17, %cst_14 {dimension_numbers = #tpu.dot_dimension_numbers<[1], [0], [0], [1], [0, 0, 1, 1], [], []>} : vector<8x4xf32>, vector<4x8xf32>, vector<8x8xf32> -> vector<8x8xf32>
        %19 = arith.addf %10, %18 : vector<8x8xf32>
        %c0_i32_15 = arith.constant 0 : i32
        %20 = arith.addi %arg7, %c0_i32_15 : i32
        %c0_16 = arith.constant 0 : index
        %c0_17 = arith.constant 0 : index
        %21 = arith.index_cast %20 : i32 to index
        %c4 = arith.constant 4 : index
        %c0_18 = arith.constant 0 : index
        %22 = vector.load %arg2[%c0_16, %c0_17, %21, %c4, %c0_18] : memref<1x1x9x16x9xf32, #tpu.memory_space<vmem>>, vector<1x1x1x4x8xf32>
        %23 = vector.shape_cast %22 : vector<1x1x1x4x8xf32> to vector<1x4x8xf32>
        %c1 = arith.constant 1 : index
        %c0_19 = arith.constant 0 : index
        %c0_20 = arith.constant 0 : index
        %24 = vector.load %arg3[%c1, %c0_19, %c0_20] : memref<9x8x4xf32, #tpu.memory_space<vmem>>, vector<1x8x4xf32>
        %25 = vector.shape_cast %24 : vector<1x8x4xf32> to vector<8x4xf32>
        %26 = vector.shape_cast %23 : vector<1x4x8xf32> to vector<4x8xf32>
        %cst_21 = arith.constant dense<0.000000e+00> : vector<8x8xf32>
        %27 = tpu.matmul %25, %26, %cst_21 {dimension_numbers = #tpu.dot_dimension_numbers<[1], [0], [0], [1], [0, 0, 1, 1], [], []>} : vector<8x4xf32>, vector<4x8xf32>, vector<8x8xf32> -> vector<8x8xf32>
        %28 = arith.addf %19, %27 : vector<8x8xf32>
        %c0_i32_22 = arith.constant 0 : i32
        %29 = arith.addi %arg7, %c0_i32_22 : i32
        %c0_23 = arith.constant 0 : index
        %c0_24 = arith.constant 0 : index
        %30 = arith.index_cast %29 : i32 to index
        %c0_25 = arith.constant 0 : index
        %c1_26 = arith.constant 1 : index
        %31 = vector.load %arg2[%c0_23, %c0_24, %30, %c0_25, %c1_26] : memref<1x1x9x16x9xf32, #tpu.memory_space<vmem>>, vector<1x1x1x4x8xf32>
        %32 = vector.shape_cast %31 : vector<1x1x1x4x8xf32> to vector<1x4x8xf32>
        %c2 = arith.constant 2 : index
        %c0_27 = arith.constant 0 : index
        %c0_28 = arith.constant 0 : index
        %33 = vector.load %arg3[%c2, %c0_27, %c0_28] : memref<9x8x4xf32, #tpu.memory_space<vmem>>, vector<1x8x4xf32>
        %34 = vector.shape_cast %33 : vector<1x8x4xf32> to vector<8x4xf32>
        %35 = vector.shape_cast %32 : vector<1x4x8xf32> to vector<4x8xf32>
        %cst_29 = arith.constant dense<0.000000e+00> : vector<8x8xf32>
        %36 = tpu.matmul %34, %35, %cst_29 {dimension_numbers = #tpu.dot_dimension_numbers<[1], [0], [0], [1], [0, 0, 1, 1], [], []>} : vector<8x4xf32>, vector<4x8xf32>, vector<8x8xf32> -> vector<8x8xf32>
        %37 = arith.addf %28, %36 : vector<8x8xf32>
        %c0_i32_30 = arith.constant 0 : i32
        %38 = arith.addi %arg7, %c0_i32_30 : i32
        %c0_31 = arith.constant 0 : index
        %c0_32 = arith.constant 0 : index
        %39 = arith.index_cast %38 : i32 to index
        %c8 = arith.constant 8 : index
        %c0_33 = arith.constant 0 : index
        %40 = vector.load %arg2[%c0_31, %c0_32, %39, %c8, %c0_33] : memref<1x1x9x16x9xf32, #tpu.memory_space<vmem>>, vector<1x1x1x4x8xf32>
        %41 = vector.shape_cast %40 : vector<1x1x1x4x8xf32> to vector<1x4x8xf32>
        %c3 = arith.constant 3 : index
        %c0_34 = arith.constant 0 : index
        %c0_35 = arith.constant 0 : index
        %42 = vector.load %arg3[%c3, %c0_34, %c0_35] : memref<9x8x4xf32, #tpu.memory_space<vmem>>, vector<1x8x4xf32>
        %43 = vector.shape_cast %42 : vector<1x8x4xf32> to vector<8x4xf32>
        %44 = vector.shape_cast %41 : vector<1x4x8xf32> to vector<4x8xf32>
        %cst_36 = arith.constant dense<0.000000e+00> : vector<8x8xf32>
        %45 = tpu.matmul %43, %44, %cst_36 {dimension_numbers = #tpu.dot_dimension_numbers<[1], [0], [0], [1], [0, 0, 1, 1], [], []>} : vector<8x4xf32>, vector<4x8xf32>, vector<8x8xf32> -> vector<8x8xf32>
        %46 = arith.addf %37, %45 : vector<8x8xf32>
        %c0_i32_37 = arith.constant 0 : i32
        %47 = arith.addi %arg7, %c0_i32_37 : i32
        %c0_38 = arith.constant 0 : index
        %c0_39 = arith.constant 0 : index
        %48 = arith.index_cast %47 : i32 to index
        %c12 = arith.constant 12 : index
        %c0_40 = arith.constant 0 : index
        %49 = vector.load %arg2[%c0_38, %c0_39, %48, %c12, %c0_40] : memref<1x1x9x16x9xf32, #tpu.memory_space<vmem>>, vector<1x1x1x4x8xf32>
        %50 = vector.shape_cast %49 : vector<1x1x1x4x8xf32> to vector<1x4x8xf32>
        %c4_41 = arith.constant 4 : index
        %c0_42 = arith.constant 0 : index
        %c0_43 = arith.constant 0 : index
        %51 = vector.load %arg3[%c4_41, %c0_42, %c0_43] : memref<9x8x4xf32, #tpu.memory_space<vmem>>, vector<1x8x4xf32>
        %52 = vector.shape_cast %51 : vector<1x8x4xf32> to vector<8x4xf32>
        %53 = vector.shape_cast %50 : vector<1x4x8xf32> to vector<4x8xf32>
        %cst_44 = arith.constant dense<0.000000e+00> : vector<8x8xf32>
        %54 = tpu.matmul %52, %53, %cst_44 {dimension_numbers = #tpu.dot_dimension_numbers<[1], [0], [0], [1], [0, 0, 1, 1], [], []>} : vector<8x4xf32>, vector<4x8xf32>, vector<8x8xf32> -> vector<8x8xf32>
        %55 = arith.addf %46, %54 : vector<8x8xf32>
        %c0_i32_45 = arith.constant 0 : i32
        %56 = arith.addi %arg7, %c0_i32_45 : i32
        %c0_46 = arith.constant 0 : index
        %c0_47 = arith.constant 0 : index
        %57 = arith.index_cast %56 : i32 to index
        %c8_48 = arith.constant 8 : index
        %c1_49 = arith.constant 1 : index
        %58 = vector.load %arg2[%c0_46, %c0_47, %57, %c8_48, %c1_49] : memref<1x1x9x16x9xf32, #tpu.memory_space<vmem>>, vector<1x1x1x4x8xf32>
        %59 = vector.shape_cast %58 : vector<1x1x1x4x8xf32> to vector<1x4x8xf32>
        %c5 = arith.constant 5 : index
        %c0_50 = arith.constant 0 : index
        %c0_51 = arith.constant 0 : index
        %60 = vector.load %arg3[%c5, %c0_50, %c0_51] : memref<9x8x4xf32, #tpu.memory_space<vmem>>, vector<1x8x4xf32>
        %61 = vector.shape_cast %60 : vector<1x8x4xf32> to vector<8x4xf32>
        %62 = vector.shape_cast %59 : vector<1x4x8xf32> to vector<4x8xf32>
        %cst_52 = arith.constant dense<0.000000e+00> : vector<8x8xf32>
        %63 = tpu.matmul %61, %62, %cst_52 {dimension_numbers = #tpu.dot_dimension_numbers<[1], [0], [0], [1], [0, 0, 1, 1], [], []>} : vector<8x4xf32>, vector<4x8xf32>, vector<8x8xf32> -> vector<8x8xf32>
        %64 = arith.addf %55, %63 : vector<8x8xf32>
        %c1_i32_53 = arith.constant 1 : i32
        %65 = arith.addi %arg7, %c1_i32_53 : i32
        %c0_54 = arith.constant 0 : index
        %c0_55 = arith.constant 0 : index
        %66 = arith.index_cast %65 : i32 to index
        %c0_56 = arith.constant 0 : index
        %c0_57 = arith.constant 0 : index
        %67 = vector.load %arg2[%c0_54, %c0_55, %66, %c0_56, %c0_57] : memref<1x1x9x16x9xf32, #tpu.memory_space<vmem>>, vector<1x1x1x4x8xf32>
        %68 = vector.shape_cast %67 : vector<1x1x1x4x8xf32> to vector<1x4x8xf32>
        %c6 = arith.constant 6 : index
        %c0_58 = arith.constant 0 : index
        %c0_59 = arith.constant 0 : index
        %69 = vector.load %arg3[%c6, %c0_58, %c0_59] : memref<9x8x4xf32, #tpu.memory_space<vmem>>, vector<1x8x4xf32>
        %70 = vector.shape_cast %69 : vector<1x8x4xf32> to vector<8x4xf32>
        %71 = vector.shape_cast %68 : vector<1x4x8xf32> to vector<4x8xf32>
        %cst_60 = arith.constant dense<0.000000e+00> : vector<8x8xf32>
        %72 = tpu.matmul %70, %71, %cst_60 {dimension_numbers = #tpu.dot_dimension_numbers<[1], [0], [0], [1], [0, 0, 1, 1], [], []>} : vector<8x4xf32>, vector<4x8xf32>, vector<8x8xf32> -> vector<8x8xf32>
        %73 = arith.addf %64, %72 : vector<8x8xf32>
        %c1_i32_61 = arith.constant 1 : i32
        %74 = arith.addi %arg7, %c1_i32_61 : i32
        %c0_62 = arith.constant 0 : index
        %c0_63 = arith.constant 0 : index
        %75 = arith.index_cast %74 : i32 to index
        %c4_64 = arith.constant 4 : index
        %c0_65 = arith.constant 0 : index
        %76 = vector.load %arg2[%c0_62, %c0_63, %75, %c4_64, %c0_65] : memref<1x1x9x16x9xf32, #tpu.memory_space<vmem>>, vector<1x1x1x4x8xf32>
        %77 = vector.shape_cast %76 : vector<1x1x1x4x8xf32> to vector<1x4x8xf32>
        %c7 = arith.constant 7 : index
        %c0_66 = arith.constant 0 : index
        %c0_67 = arith.constant 0 : index
        %78 = vector.load %arg3[%c7, %c0_66, %c0_67] : memref<9x8x4xf32, #tpu.memory_space<vmem>>, vector<1x8x4xf32>
        %79 = vector.shape_cast %78 : vector<1x8x4xf32> to vector<8x4xf32>
        %80 = vector.shape_cast %77 : vector<1x4x8xf32> to vector<4x8xf32>
        %cst_68 = arith.constant dense<0.000000e+00> : vector<8x8xf32>
        %81 = tpu.matmul %79, %80, %cst_68 {dimension_numbers = #tpu.dot_dimension_numbers<[1], [0], [0], [1], [0, 0, 1, 1], [], []>} : vector<8x4xf32>, vector<4x8xf32>, vector<8x8xf32> -> vector<8x8xf32>
        %82 = arith.addf %73, %81 : vector<8x8xf32>
        %c1_i32_69 = arith.constant 1 : i32
        %83 = arith.addi %arg7, %c1_i32_69 : i32
        %c0_70 = arith.constant 0 : index
        %c0_71 = arith.constant 0 : index
        %84 = arith.index_cast %83 : i32 to index
        %c0_72 = arith.constant 0 : index
        %c1_73 = arith.constant 1 : index
        %85 = vector.load %arg2[%c0_70, %c0_71, %84, %c0_72, %c1_73] : memref<1x1x9x16x9xf32, #tpu.memory_space<vmem>>, vector<1x1x1x4x8xf32>
        %86 = vector.shape_cast %85 : vector<1x1x1x4x8xf32> to vector<1x4x8xf32>
        %c8_74 = arith.constant 8 : index
        %c0_75 = arith.constant 0 : index
        %c0_76 = arith.constant 0 : index
        %87 = vector.load %arg3[%c8_74, %c0_75, %c0_76] : memref<9x8x4xf32, #tpu.memory_space<vmem>>, vector<1x8x4xf32>
        %88 = vector.shape_cast %87 : vector<1x8x4xf32> to vector<8x4xf32>
        %89 = vector.shape_cast %86 : vector<1x4x8xf32> to vector<4x8xf32>
        %cst_77 = arith.constant dense<0.000000e+00> : vector<8x8xf32>
        %90 = tpu.matmul %88, %89, %cst_77 {dimension_numbers = #tpu.dot_dimension_numbers<[1], [0], [0], [1], [0, 0, 1, 1], [], []>} : vector<8x4xf32>, vector<4x8xf32>, vector<8x8xf32> -> vector<8x8xf32>
        %91 = arith.addf %82, %90 : vector<8x8xf32>
        %c8_i32_78 = arith.constant 8 : i32
        %92 = arith.muli %arg1, %c8_i32_78 : i32
        %93 = arith.addi %92, %arg7 : i32
        %94 = vector.shape_cast %91 : vector<8x8xf32> to vector<8x1x8xf32>
        %c0_79 = arith.constant 0 : index
        %95 = arith.index_cast %93 : i32 to index
        %c0_80 = arith.constant 0 : index
        %96 = vector.load %arg5[%c0_79, %95, %c0_80] : memref<8x8x8xf32, #tpu.memory_space<vmem>>, vector<8x1x8xf32>
        tpu.vector_store %arg5[%c0_79, %95, %c0_80], %94 {strides = array<i32>} : memref<8x8x8xf32, #tpu.memory_space<vmem>>, vector<8x1x8xf32>,
        %c0_81 = arith.constant 0 : index
        %c0_82 = arith.constant 0 : index
        %c0_83 = arith.constant 0 : index
        %97 = vector.load %arg6[%c0_81, %c0_82, %c0_83] : memref<2x8x1xf32, #tpu.memory_space<vmem>>, vector<1x8x1xf32>
        %98 = vector.shape_cast %97 : vector<1x8x1xf32> to vector<8x1xf32>
        %cst_84 = arith.constant dense<0.000000e+00> : vector<8xf32>
        %99 = vector.multi_reduction <add>, %91, %cst_84 [1] : vector<8x8xf32> to vector<8xf32>
        %100 = vector.shape_cast %99 : vector<8xf32> to vector<8x1xf32>
        %101 = arith.addf %98, %100 : vector<8x1xf32>
        %c0_85 = arith.constant 0 : index
        %c0_86 = arith.constant 0 : index
        %c0_87 = arith.constant 0 : index
        %102 = vector.load %arg6[%c0_85, %c0_86, %c0_87] : memref<2x8x1xf32, #tpu.memory_space<vmem>>, vector<1x8x1xf32>
        %103 = vector.shape_cast %102 : vector<1x8x1xf32> to vector<8x1xf32>
        %104 = vector.shape_cast %101 : vector<8x1xf32> to vector<1x8x1xf32>
        tpu.vector_store %arg6[%c0_85, %c0_86, %c0_87], %104 {strides = array<i32>} : memref<2x8x1xf32, #tpu.memory_space<vmem>>, vector<1x8x1xf32>,
        %c1_88 = arith.constant 1 : index
        %c0_89 = arith.constant 0 : index
        %c0_90 = arith.constant 0 : index
        %105 = vector.load %arg6[%c1_88, %c0_89, %c0_90] : memref<2x8x1xf32, #tpu.memory_space<vmem>>, vector<1x8x1xf32>
        %106 = vector.shape_cast %105 : vector<1x8x1xf32> to vector<8x1xf32>
        %107 = arith.mulf %91, %91 : vector<8x8xf32>
        %cst_91 = arith.constant dense<0.000000e+00> : vector<8xf32>
        %108 = vector.multi_reduction <add>, %107, %cst_91 [1] : vector<8x8xf32> to vector<8xf32>
        %109 = vector.shape_cast %108 : vector<8xf32> to vector<8x1xf32>
        %110 = arith.addf %106, %109 : vector<8x1xf32>
        %c1_92 = arith.constant 1 : index
        %c0_93 = arith.constant 0 : index
        %c0_94 = arith.constant 0 : index
        %111 = vector.load %arg6[%c1_92, %c0_93, %c0_94] : memref<2x8x1xf32, #tpu.memory_space<vmem>>, vector<1x8x1xf32>
        %112 = vector.shape_cast %111 : vector<1x8x1xf32> to vector<8x1xf32>
        %113 = vector.shape_cast %110 : vector<8x1xf32> to vector<1x8x1xf32>
        tpu.vector_store %arg6[%c1_92, %c0_93, %c0_94], %113 {strides = array<i32>} : memref<2x8x1xf32, #tpu.memory_space<vmem>>, vector<1x8x1xf32>,
      }
      %c8_i32_6 = arith.constant 8 : i32
    } else {
    }
    %c1_i32_0 = arith.constant 1 : i32
    %3 = arith.cmpi sge, %arg1, %c1_i32_0 : i32
    %4 = arith.extui %3 : i1 to i32
    %c0_i32_1 = arith.constant 0 : i32
    %5 = arith.cmpi ne, %4, %c0_i32_1 : i32
    scf.if %5 {
      %c0 = arith.constant 0 : index
      %c0_2 = arith.constant 0 : index
      %c0_3 = arith.constant 0 : index
      %6 = vector.load %arg6[%c0, %c0_2, %c0_3] : memref<2x8x1xf32, #tpu.memory_space<vmem>>, vector<1x8x1xf32>
      %7 = vector.shape_cast %6 : vector<1x8x1xf32> to vector<8x1xf32>
      %cst = arith.constant 1.562500e-02 : f32
      %8 = vector.broadcast %cst : f32 to vector<8x1xf32>
      %9 = arith.mulf %7, %8 : vector<8x1xf32>
      %c1 = arith.constant 1 : index
      %c0_4 = arith.constant 0 : index
      %c0_5 = arith.constant 0 : index
      %10 = vector.load %arg6[%c1, %c0_4, %c0_5] : memref<2x8x1xf32, #tpu.memory_space<vmem>>, vector<1x8x1xf32>
      %11 = vector.shape_cast %10 : vector<1x8x1xf32> to vector<8x1xf32>
      %cst_6 = arith.constant 1.562500e-02 : f32
      %12 = vector.broadcast %cst_6 : f32 to vector<8x1xf32>
      %13 = arith.mulf %11, %12 : vector<8x1xf32>
      %14 = arith.mulf %9, %9 : vector<8x1xf32>
      %15 = arith.subf %13, %14 : vector<8x1xf32>
      %cst_7 = arith.constant 9.99999974E-6 : f32
      %16 = vector.broadcast %cst_7 : f32 to vector<8x1xf32>
      %17 = arith.addf %15, %16 : vector<8x1xf32>
      %18 = math.rsqrt %17 : vector<8x1xf32>
      %c1_i32_8 = arith.constant 1 : i32
      %19 = arith.subi %arg1, %c1_i32_8 : i32
      %c8_i32 = arith.constant 8 : i32
      %20 = arith.muli %19, %c8_i32 : i32
      %21 = tpu.assume_multiple %20, 8 : i32
      %c0_9 = arith.constant 0 : index
      %22 = arith.index_cast %21 : i32 to index
      %c0_10 = arith.constant 0 : index
      %23 = vector.load %arg5[%c0_9, %22, %c0_10] : memref<8x8x8xf32, #tpu.memory_space<vmem>>, vector<8x8x8xf32>
      %24 = vector.shape_cast %9 : vector<8x1xf32> to vector<8x1x1xf32>
      %25 = vector.broadcast %24 : vector<8x1x1xf32> to vector<8x8x8xf32>
      %26 = arith.subf %23, %25 : vector<8x8x8xf32>
      %27 = vector.shape_cast %18 : vector<8x1xf32> to vector<8x1x1xf32>
      %28 = vector.broadcast %27 : vector<8x1x1xf32> to vector<8x8x8xf32>
      %29 = arith.mulf %26, %28 : vector<8x8x8xf32>
      %cst_11 = arith.constant 0.000000e+00 : f32
      %30 = vector.broadcast %cst_11 : f32 to vector<8x8x8xf32>
      %31 = arith.maximumf %29, %30 : vector<8x8x8xf32>
      %c0_12 = arith.constant 0 : index
      %c0_13 = arith.constant 0 : index
      %c0_14 = arith.constant 0 : index
      %c0_15 = arith.constant 0 : index
      %32 = vector.load %arg4[%c0_12, %c0_13, %c0_14, %c0_15] : memref<1x8x8x8xf32, #tpu.memory_space<vmem>>, vector<1x8x8x8xf32>
      %33 = vector.shape_cast %32 : vector<1x8x8x8xf32> to vector<8x8x8xf32>
      %34 = vector.shape_cast %31 : vector<8x8x8xf32> to vector<1x8x8x8xf32>
      tpu.vector_store %arg4[%c0_12, %c0_13, %c0_14, %c0_15], %34 {strides = array<i32>} : memref<1x8x8x8xf32, #tpu.memory_space<vmem>>, vector<1x8x8x8xf32>,
    } else {
    }
    return
  }
  func.func @transform_0(%arg0: i32, %arg1: i32) -> (i32, i32, i32, i32, i32) {
    %c0_i32 = arith.constant 0 : i32
    %0 = arith.minsi %arg1, %c0_i32 : i32
    %c0_i32_0 = arith.constant 0 : i32
    %c0_i32_1 = arith.constant 0 : i32
    %c0_i32_2 = arith.constant 0 : i32
    %c0_i32_3 = arith.constant 0 : i32
    return %arg0, %0, %c0_i32_0, %c0_i32_1, %c0_i32_2 : i32, i32, i32, i32, i32
  }
  func.func @transform_1(%arg0: i32, %arg1: i32) -> (i32, i32, i32) {
    %c0_i32 = arith.constant 0 : i32
    %c0_i32_0 = arith.constant 0 : i32
    %c0_i32_1 = arith.constant 0 : i32
    %c0_i32_2 = arith.constant 0 : i32
    return %c0_i32, %c0_i32_0, %c0_i32_1 : i32, i32, i32
  }
  func.func @transform_2(%arg0: i32, %arg1: i32) -> (i32, i32, i32, i32) {
    %c1_i32 = arith.constant 1 : i32
    %0 = arith.subi %arg1, %c1_i32 : i32
    %c0_i32 = arith.constant 0 : i32
    %1 = arith.maxsi %0, %c0_i32 : i32
    %c0_i32_0 = arith.constant 0 : i32
    %c0_i32_1 = arith.constant 0 : i32
    %c0_i32_2 = arith.constant 0 : i32
    return %arg0, %c0_i32_0, %1, %c0_i32_1 : i32, i32, i32, i32
  }
}

</mosaic_0001>

<llo_original>
// kernel: tpu_custom_call.1
$region0: #{tpu_custom_call.1}
  #allocation0 [shape = 'u32[]', space=smem, size = 0x4, offset = 0x4, fixed_abs, tag = 'smem constant byte address 0x4 - core index']
  #allocation1 [shape = 'u32[144,128]{1,0:T(1,128)}', space=vmem, size = 0x12000, scoped, tag = 'internal scratch']
  #allocation2 [shape = 'f32[8,8,8]{2,1,0:T(8,128)}', space=vmem, size = 0x8000, scoped, tag = 'scratch operand']
  #allocation3 [shape = 'f32[2,8,1]{2,1,0:T(8,128)}', space=vmem, size = 0x2000, scoped, tag = 'scratch operand']
  %s0 = inlined_call_operand.vmem [shape: f32[2,1,9,16,9], index: 0, kind: input, shape index: {}]
  %s1 = inlined_call_operand.vmem [shape: f32[9,8,4], index: 1, kind: input, shape index: {}]
  %s2 = inlined_call_operand.hbm [shape: f32[2,8,8,8], index: 2, kind: output, shape index: {}]
  %s3 = sld [smem:[#allocation0]]
  $region60: #{tpu_custom_call.1} parent=0
    _
  %s5 = ssub.s32 1, %s3
  %s6 = scalar_select 0, %s5, %s3
  $region1: #{tpu_custom_call.1} parent=0
    #allocation4 [shape = 'u8[65536]{0}', space=vmem, size = 0x10000, scoped, tag = 'output window, operand 0']
    #allocation5 [shape = 's32[2]{0}', space=sflag, size = 0x8, scoped, tag = 'scoped memory for tpu_custom_call.1']
    %7 = vsyncpa [#allocation5], 0
    %s8 = scalar_lea.sflag [#allocation5], 1
    %9 = vsyncpa %s8, 0
    loop: start=0, step=1, limit=6
    $region2: #{tpu_custom_call.1} parent=1 // loop_pre_header
      _
    $region3: #{tpu_custom_call.1} parent=1 // loop_header
      %s11 = sphi 0, %s15
      %p12 = scmp.ge.s32.totalorder %s11, 6
      %s18 = sphi 0, %s30
      %s19 = sphi 0, %s26
      %s20 = sphi 0, %s18
      %s21 = sphi 0, %s19
      %s22 = sphi 0, %s20
      %s23 = sphi 0, %s21
      %s39 = sphi 0, %s41
      %s42 = sphi 0, %s39
      %s43 = sphi 0, %s42
      %s59 = sphi 0, %s43
      %s63 = sphi 0, %s63
      %s65 = sphi 0, %s63
      %s66 = sphi 0, %s65
      %s80 = sphi 0, %s66
      %s94 = sphi 0, %s96
      %s97 = sphi 0, %s94
      %s98 = sphi 0, %s97
      %s114 = sphi 0, %s98
    $region4: #{tpu_custom_call.1} parent=1 // loop_header_branch
      %14 = sbr.rel (%p12) target = $region8
    $region5: #{tpu_custom_call.1} parent=1 // loop_body
      %s16 = ssub.s32 %s11, 1
      %s17 = ssub.s32 %s11, 2
      %s24 = sadd.s32 1, %s19
      %p25 = scmp.ge.s32.totalorder %s24, 2
      %s26 = scalar_select %p25, 0, %s24
      %s27 = sadd.s32 1, %s18
      %s28 = scalar_select %p25, %s27, %s18
      %p29 = scmp.ge.s32.totalorder %s28, 2
      %s30 = scalar_select %p29, 0, %s28
      %p31 = scmp.lt.s32.totalorder %s19, 0
      %s32 = scalar_select %p31, %s19, 0
      %p33 = scmp.lt.s32.totalorder %s26, 0
      %s34 = scalar_select %p33, %s26, 0
      %s35 = ssub.s32 %s18, %s30
      %s36 = ssub.s32 %s32, %s34
      %s37 = sor.u32 %s35, %s36
      %p38 = scmp.eq.s32.totalorder %s37, 0
      %s40 = sadd.s32 %s39, 1
      %s41 = scalar_select %p38, %s39, %s40
      %p44 = pneg %p38
      %p45 = scmp.eq.s32.totalorder %s11, 3
      %p46 = por %p44, %p45
      %p47 = scmp.ne.s32.totalorder %s39, %s42
      %p48 = scmp.eq.s32.totalorder %s11, 0
      %p49 = por %p47, %p48
      %p50 = scmp.ne.s32.totalorder %s39, %s42
      %p51 = scmp.eq.s32.totalorder %s16, 3
      %p52 = por %p50, %p51
      %p53 = scmp.ne.s32.totalorder %s42, %s43
      %p54 = scmp.eq.s32.totalorder %s16, 0
      %p55 = por %p53, %p54
      %p56 = scmp.ne.s32.totalorder %s42, %s43
      %p57 = scmp.eq.s32.totalorder %s17, 3
      %p58 = por %p56, %p57
      %p60 = scmp.ne.s32.totalorder %s43, %s59
      %p61 = scmp.eq.s32.totalorder %s17, 0
      %p62 = por %p60, %p61
      %s64 = sadd.s32 %s63, 1
      %p67 = scmp.eq.s32.totalorder %s11, 3
      %p68 = scmp.ne.s32.totalorder %s63, %s65
      %p69 = scmp.eq.s32.totalorder %s11, 0
      %p70 = por %p68, %p69
      %p71 = scmp.ne.s32.totalorder %s63, %s65
      %p72 = scmp.eq.s32.totalorder %s16, 3
      %p73 = por %p71, %p72
      %p74 = scmp.ne.s32.totalorder %s65, %s66
      %p75 = scmp.eq.s32.totalorder %s16, 0
      %p76 = por %p74, %p75
      %p77 = scmp.ne.s32.totalorder %s65, %s66
      %p78 = scmp.eq.s32.totalorder %s17, 3
      %p79 = por %p77, %p78
      %p81 = scmp.ne.s32.totalorder %s66, %s80
      %p82 = scmp.eq.s32.totalorder %s17, 0
      %p83 = por %p81, %p82
      %s84 = ssub.s32 %s19, 1
      %p85 = scmp.gt.s32.totalorder %s84, 0
      %s86 = scalar_select %p85, %s84, 0
      %s87 = ssub.s32 %s26, 1
      %p88 = scmp.gt.s32.totalorder %s87, 0
      %s89 = scalar_select %p88, %s87, 0
      %s90 = ssub.s32 %s18, %s30
      %s91 = ssub.s32 %s86, %s89
      %s92 = sor.u32 %s90, %s91
      %p93 = scmp.eq.s32.totalorder %s92, 0
      %s95 = sadd.s32 %s94, 1
      %s96 = scalar_select %p93, %s94, %s95
      %p99 = pneg %p93
      %p100 = scmp.eq.s32.totalorder %s11, 3
      %p101 = por %p99, %p100
      %p102 = scmp.ne.s32.totalorder %s94, %s97
      %p103 = scmp.eq.s32.totalorder %s11, 0
      %p104 = por %p102, %p103
      %p105 = scmp.ne.s32.totalorder %s94, %s97
      %p106 = scmp.eq.s32.totalorder %s16, 3
      %p107 = por %p105, %p106
      %p108 = scmp.ne.s32.totalorder %s97, %s98
      %p109 = scmp.eq.s32.totalorder %s16, 0
      %p110 = por %p108, %p109
      %p111 = scmp.ne.s32.totalorder %s97, %s98
      %p112 = scmp.eq.s32.totalorder %s17, 3
      %p113 = por %p111, %p112
      %p115 = scmp.ne.s32.totalorder %s98, %s114
      %p116 = scmp.eq.s32.totalorder %s17, 0
      %p117 = por %p115, %p116
      %p118 = scmp.le.s32.totalorder 1, %s11
      %p119 = scmp.lt.s32.totalorder %s11, 5
      %p120 = pnand %p118, %p119
      %p121 = pneg %p120
      // Predicated region
      $region9: #{tpu_custom_call.1} parent=5 // pred_check
        _
      $region10: #{tpu_custom_call.1} parent=5 // pred_check_branch
        %123 = sbr.rel (%p120) target = $region12
      $region11: #{tpu_custom_call.1} parent=5 // pred_region
        %s124 = ssub.s32 %s11, 1
        // Predicated region
        $region13: #{tpu_custom_call.1} parent=11 // pred_check
          %p125 = pneg %p76
        $region14: #{tpu_custom_call.1} parent=11 // pred_check_branch
          %127 = sbr.rel (%p125) target = $region16
        $region15: #{tpu_custom_call.1} parent=11 // pred_region
          _
        $region16: #{tpu_custom_call.1} parent=11 // pred_fallthru
          _
      $region12: #{tpu_custom_call.1} parent=5 // pred_fallthru
        _
      %p128 = scmp.lt.s32.totalorder %s11, 4
      // Predicated region
      $region17: #{tpu_custom_call.1} parent=5 // pred_check
        %p129 = pneg %p128
      $region18: #{tpu_custom_call.1} parent=5 // pred_check_branch
        %131 = sbr.rel (%p129) target = $region20
      $region19: #{tpu_custom_call.1} parent=5 // pred_region
        // Predicated region
        $region21: #{tpu_custom_call.1} parent=19 // pred_check
          %p132 = pneg %p49
        $region22: #{tpu_custom_call.1} parent=19 // pred_check_branch
          %134 = sbr.rel (%p132) target = $region24
        $region23: #{tpu_custom_call.1} parent=19 // pred_region
          %p135 = scmp.lt.s32.totalorder %s19, 0
          %s136 = scalar_select %p135, %s19, 0
          %p137 = scmp.lt.s32.totalorder %s18, 1
          %s138 = scalar_select %p137, %s18, 1
          %p139 = scmp.lt.s32.totalorder %s136, 0
          %s140 = scalar_select %p139, %s136, 0
          %s141 = smul.addr %s140, 18
          %s142 = smul.addr %s138, 18
          %s143 = sadd.s32 %s141, %s142
          %s144 = smul.addr %s143, 8
          %s145 = scalar_lea.vmem %s0, %s144
          %p146 = scmp.lt.s32.totalorder %s19, 0
          %s147 = scalar_select %p146, %s19, 0
        $region24: #{tpu_custom_call.1} parent=19 // pred_fallthru
          _
      $region20: #{tpu_custom_call.1} parent=5 // pred_fallthru
        _
      %p148 = scmp.le.s32.totalorder 1, %s11
      %p149 = scmp.lt.s32.totalorder %s11, 5
      %p150 = pnand %p148, %p149
      %p151 = pneg %p150
      // Predicated region
      $region25: #{tpu_custom_call.1} parent=5 // pred_check
        _
      $region26: #{tpu_custom_call.1} parent=5 // pred_check_branch
        %153 = sbr.rel (%p150) target = $region28
      $region27: #{tpu_custom_call.1} parent=5 // pred_region
        %s154 = ssub.s32 %s11, 1
        %p155 = scmp.lt.s32.totalorder %s21, 0
        %s156 = scalar_select %p155, %s21, 0
        %p157 = scmp.lt.s32.totalorder %s20, 1
        %s158 = scalar_select %p157, %s20, 1
        %p159 = scmp.lt.s32.totalorder %s156, 0
        %s160 = scalar_select %p159, %s156, 0
        %s161 = smul.addr %s160, 18
        %s162 = smul.addr %s158, 18
        %s163 = sadd.s32 %s161, %s162
        %s164 = smul.addr %s163, 8
        %s165 = scalar_lea.vmem %s0, %s164
        %p166 = pneg %p55
        %p167 = pneg %p52
        %p168 = pneg %p76
        %p169 = pneg %p73
        %p170 = pneg %p110
        %p171 = pneg %p107
        %s172 = sand.u32 %s97, 1
        %s173 = scalar_lea.sflag [#allocation5], %s172
        %s174 = sand.u32 %s97, 1
        %s175 = smul.addr %s174, 64
        %s176 = scalar_lea.vmem [#allocation4], %s175
        %p177 = scmp.lt.s32.totalorder %s21, 0
        %s178 = scalar_select %p177, %s21, 0
        %p179 = scmp.lt.s32.totalorder %s20, 1
        %s180 = scalar_select %p179, %s20, 1
        %p181 = scmp.lt.s32.totalorder %s178, 0
        %s182 = scalar_select %p181, %s178, 0
        %s183 = smul.addr %s182, 18
        %s184 = smul.addr %s180, 18
        %s185 = sadd.s32 %s183, %s184
        %s186 = smul.addr %s185, 8
        %s187 = scalar_lea.vmem %s0, %s186
        %p188 = scmp.lt.s32.totalorder %s21, 0
        %s189 = scalar_select %p188, %s21, 0
        %s190 = ssub.s32 %s21, 1
        %p191 = scmp.gt.s32.totalorder %s190, 0
        %s192 = scalar_select %p191, %s190, 0
        %p193 = scmp.lt.s32.totalorder %s21, 1
        // Predicated region
        $region29: #{tpu_custom_call.1} parent=27 // pred_check
          %p194 = pneg %p193
        $region30: #{tpu_custom_call.1} parent=27 // pred_check_branch
          %196 = sbr.rel (%p194) target = $region32
        $region31: #{tpu_custom_call.1} parent=27 // pred_region
          %p197 = scmp.eq.s32.totalorder %s21, 0
          // Predicated region
          $region33: #{tpu_custom_call.1} parent=31 // pred_check
            %p198 = pneg %p197
          $region34: #{tpu_custom_call.1} parent=31 // pred_check_branch
            %200 = sbr.rel (%p198) target = $region36
          $region35: #{tpu_custom_call.1} parent=31 // pred_region
            %vm201 = vcmask 7168
            %202 = vst.msk [vmem:[#allocation3] sm:$0xff] %vm201, 0.0
            %203 = vst.msk [vmem:[#allocation3 + $0x8] sm:$0xff] %vm201, 0.0
          $region36: #{tpu_custom_call.1} parent=31 // pred_fallthru
            _
          loop: start=0, step=1, limit=8
          $region37: #{tpu_custom_call.1} parent=31 // loop_pre_header
            _
          $region38: #{tpu_custom_call.1} parent=31 // loop_header
            %s205 = sphi 0, %s209
            %p206 = scmp.ge.s32.totalorder %s205, 8
          $region39: #{tpu_custom_call.1} parent=31 // loop_header_branch
            %208 = sbr.rel (%p206) target = $region43
          $region40: #{tpu_custom_call.1} parent=31 // loop_body
            %s210 = smul.u32 %s205, 16
            %s211 = scalar_lea.vmem %s187, %s210
            %v212 = vld [vmem:[%s211] sm:$0xf]
            %v213 = vld [vmem:[%s1] sm:$0xff]
            %v214 = vld [vmem:[%s211 + $0x4] sm:$0xf]
            %s215 = scalar_lea.vmem %s1, 8
            %v216 = vld [vmem:[%s215] sm:$0xff]
            %vm217 = vcmask 31744
            %v219 = vsel %vm217, %v216, 0
            %vm221 = vcmask 1043456
            %v223 = vsel %vm221, %v214, 0
            %225 = vmatprep.subr.mxu0 0.0
            %226 = vmatpush1.msra.mxu0 %v223
            %227 = vmatprep.subr.mxu0 0.0
            %228 = vmatpush1.msra.mxu0 0.0
            %229 = vmatprep.subr.mxu0 0.0
            %230 = vmatpush1.msra.mxu0 0.0
            %231 = vmatprep.subr.mxu0 0.0
            %232 = vmatpush1.msra.mxu0 0.0
            %233 = vmatprep.subr.mxu0 0.0
            %234 = vmatpush1.msra.mxu0 0.0
            %235 = vmatprep.subr.mxu0 0.0
            %236 = vmatpush1.msra.mxu0 0.0
            %237 = vmatprep.subr.mxu0 0.0
            %238 = vmatpush1.msra.mxu0 0.0
            %239 = vmatprep.subr.mxu0 0.0
            %240 = vmatpush1.msra.mxu0 0.0
            %241 = vmatprep.subr.mxu0 0.0
            %242 = vmatpush1.msra.mxu0 0.0
            %243 = vmatprep.subr.mxu0 0.0
            %244 = vmatpush1.msra.mxu0 0.0
            %245 = vmatprep.subr.mxu0 0.0
            %246 = vmatpush1.msra.mxu0 0.0
            %247 = vmatprep.subr.mxu0 0.0
            %248 = vmatpush1.msra.mxu0 0.0
            %249 = vmatprep.subr.mxu0 0.0
            %250 = vmatpush1.msra.mxu0 0.0
            %251 = vmatprep.subr.mxu0 0.0
            %252 = vmatpush1.msra.mxu0 0.0
            %253 = vmatprep.subr.mxu0 0.0
            %254 = vmatpush1.msra.mxu0 0.0
            %255 = vmatprep.subr.mxu0 0.0
            %256 = vmatpush1.msra.mxu0 0.0
            %257 = vmatprep.subr.mxu0 0.0
            %258 = vmatpush1.msra.mxu0 0.0
            %259 = vmatprep.subr.mxu0 0.0
            %260 = vmatpush1.msra.mxu0 0.0
            %261 = vmatprep.subr.mxu0 0.0
            %262 = vmatpush1.msra.mxu0 0.0
            %263 = vmatprep.subr.mxu0 0.0
            %264 = vmatpush1.msra.mxu0 0.0
            %265 = vmatprep.subr.mxu0 0.0
            %266 = vmatpush1.msra.mxu0 0.0
            %267 = vmatprep.subr.mxu0 0.0
            %268 = vmatpush1.msra.mxu0 0.0
            %269 = vmatprep.subr.mxu0 0.0
            %270 = vmatpush1.msra.mxu0 0.0
            %271 = vmatprep.subr.mxu0 0.0
            %272 = vmatpush1.msra.mxu0 0.0
            %273 = vmatprep.subr.mxu0 0.0
            %274 = vmatpush1.msra.mxu0 0.0
            %275 = vmatprep.subr.mxu0 0.0
            %276 = vmatpush1.msra.mxu0 0.0
            %277 = vmatprep.subr.mxu0 0.0
            %278 = vmatpush1.msra.mxu0 0.0
            %279 = vmatprep.subr.mxu0 0.0
            %280 = vmatpush1.msra.mxu0 0.0
            %281 = vmatprep.subr.mxu0 0.0
            %282 = vmatpush1.msra.mxu0 0.0
            %283 = vmatprep.subr.mxu0 0.0
            %284 = vmatpush1.msra.mxu0 0.0
            %285 = vmatprep.subr.mxu0 0.0
            %286 = vmatpush1.msra.mxu0 0.0
            %287 = vmatprep.subr.mxu0 0.0
            %288 = vmatpush1.msra.mxu0 0.0
            %289 = vmatprep.mubr.f32.mxu0 0.0
            %290 = vmatmul.mubr.f32.gmra.mrb[0].mxu0 %v219
            %v291 = vpop.f32.mrb[0].mxu0
            %v292 = vadd.f32 0.0, %v291
            %v293 = vpop.f32.mrb[0].mxu0
            %294 = vdwg.mxu0
            %v296 = vsel %vm217, %v213, 0
            %v299 = vsel %vm221, %v212, 0
            %301 = vmatprep.subr.mxu0 0.0
            %302 = vmatpush1.msra.mxu0 %v299
            %303 = vmatprep.subr.mxu0 0.0
            %304 = vmatpush1.msra.mxu0 0.0
            %305 = vmatprep.subr.mxu0 0.0
            %306 = vmatpush1.msra.mxu0 0.0
            %307 = vmatprep.subr.mxu0 0.0
            %308 = vmatpush1.msra.mxu0 0.0
            %309 = vmatprep.subr.mxu0 0.0
            %310 = vmatpush1.msra.mxu0 0.0
            %311 = vmatprep.subr.mxu0 0.0
            %312 = vmatpush1.msra.mxu0 0.0
            %313 = vmatprep.subr.mxu0 0.0
            %314 = vmatpush1.msra.mxu0 0.0
            %315 = vmatprep.subr.mxu0 0.0
            %316 = vmatpush1.msra.mxu0 0.0
            %317 = vmatprep.subr.mxu0 0.0
            %318 = vmatpush1.msra.mxu0 0.0
            %319 = vmatprep.subr.mxu0 0.0
            %320 = vmatpush1.msra.mxu0 0.0
            %321 = vmatprep.subr.mxu0 0.0
            %322 = vmatpush1.msra.mxu0 0.0
            %323 = vmatprep.subr.mxu0 0.0
            %324 = vmatpush1.msra.mxu0 0.0
            %325 = vmatprep.subr.mxu0 0.0
            %326 = vmatpush1.msra.mxu0 0.0
            %327 = vmatprep.subr.mxu0 0.0
            %328 = vmatpush1.msra.mxu0 0.0
            %329 = vmatprep.subr.mxu0 0.0
            %330 = vmatpush1.msra.mxu0 0.0
            %331 = vmatprep.subr.mxu0 0.0
            %332 = vmatpush1.msra.mxu0 0.0
            %333 = vmatprep.subr.mxu0 0.0
            %334 = vmatpush1.msra.mxu0 0.0
            %335 = vmatprep.subr.mxu0 0.0
            %336 = vmatpush1.msra.mxu0 0.0
            %337 = vmatprep.subr.mxu0 0.0
            %338 = vmatpush1.msra.mxu0 0.0
            %339 = vmatprep.subr.mxu0 0.0
            %340 = vmatpush1.msra.mxu0 0.0
            %341 = vmatprep.subr.mxu0 0.0
            %342 = vmatpush1.msra.mxu0 0.0
            %343 = vmatprep.subr.mxu0 0.0
            %344 = vmatpush1.msra.mxu0 0.0
            %345 = vmatprep.subr.mxu0 0.0
            %346 = vmatpush1.msra.mxu0 0.0
            %347 = vmatprep.subr.mxu0 0.0
            %348 = vmatpush1.msra.mxu0 0.0
            %349 = vmatprep.subr.mxu0 0.0
            %350 = vmatpush1.msra.mxu0 0.0
            %351 = vmatprep.subr.mxu0 0.0
            %352 = vmatpush1.msra.mxu0 0.0
            %353 = vmatprep.subr.mxu0 0.0
            %354 = vmatpush1.msra.mxu0 0.0
            %355 = vmatprep.subr.mxu0 0.0
            %356 = vmatpush1.msra.mxu0 0.0
            %357 = vmatprep.subr.mxu0 0.0
            %358 = vmatpush1.msra.mxu0 0.0
            %359 = vmatprep.subr.mxu0 0.0
            %360 = vmatpush1.msra.mxu0 0.0
            %361 = vmatprep.subr.mxu0 0.0
            %362 = vmatpush1.msra.mxu0 0.0
            %363 = vmatprep.subr.mxu0 0.0
            %364 = vmatpush1.msra.mxu0 0.0
            %365 = vmatprep.mubr.f32.mxu0 0.0
            %366 = vmatmul.mubr.f32.gmra.mrb[0].mxu0 %v296
            %v367 = vpop.f32.mrb[0].mxu0
            %v368 = vadd.f32 %v292, %v367
            %v369 = vpop.f32.mrb[0].mxu0
            %370 = vdwg.mxu0
            %s371 = scalar_lea.vmem %s1, 16
            %v372 = vld [vmem:[%s371] sm:$0xff]
            %373 = vrot.lane.b32.xlu0 %v212, 127
            %v374 = vpop.permute.xlu0 %373
            %v376 = vsel %vm217, %v372, 0
            %v378 = vsel %vm221, %v374, 0
            %380 = vmatprep.subr.mxu0 0.0
            %381 = vmatpush1.msra.mxu0 %v378
            %382 = vmatprep.subr.mxu0 0.0
            %383 = vmatpush1.msra.mxu0 0.0
            %384 = vmatprep.subr.mxu0 0.0
            %385 = vmatpush1.msra.mxu0 0.0
            %386 = vmatprep.subr.mxu0 0.0
            %387 = vmatpush1.msra.mxu0 0.0
            %388 = vmatprep.subr.mxu0 0.0
            %389 = vmatpush1.msra.mxu0 0.0
            %390 = vmatprep.subr.mxu0 0.0
            %391 = vmatpush1.msra.mxu0 0.0
            %392 = vmatprep.subr.mxu0 0.0
            %393 = vmatpush1.msra.mxu0 0.0
            %394 = vmatprep.subr.mxu0 0.0
            %395 = vmatpush1.msra.mxu0 0.0
            %396 = vmatprep.subr.mxu0 0.0
            %397 = vmatpush1.msra.mxu0 0.0
            %398 = vmatprep.subr.mxu0 0.0
            %399 = vmatpush1.msra.mxu0 0.0
            %400 = vmatprep.subr.mxu0 0.0
            %401 = vmatpush1.msra.mxu0 0.0
            %402 = vmatprep.subr.mxu0 0.0
            %403 = vmatpush1.msra.mxu0 0.0
            %404 = vmatprep.subr.mxu0 0.0
            %405 = vmatpush1.msra.mxu0 0.0
            %406 = vmatprep.subr.mxu0 0.0
            %407 = vmatpush1.msra.mxu0 0.0
            %408 = vmatprep.subr.mxu0 0.0
            %409 = vmatpush1.msra.mxu0 0.0
            %410 = vmatprep.subr.mxu0 0.0
            %411 = vmatpush1.msra.mxu0 0.0
            %412 = vmatprep.subr.mxu0 0.0
            %413 = vmatpush1.msra.mxu0 0.0
            %414 = vmatprep.subr.mxu0 0.0
            %415 = vmatpush1.msra.mxu0 0.0
            %416 = vmatprep.subr.mxu0 0.0
            %417 = vmatpush1.msra.mxu0 0.0
            %418 = vmatprep.subr.mxu0 0.0
            %419 = vmatpush1.msra.mxu0 0.0
            %420 = vmatprep.subr.mxu0 0.0
            %421 = vmatpush1.msra.mxu0 0.0
            %422 = vmatprep.subr.mxu0 0.0
            %423 = vmatpush1.msra.mxu0 0.0
            %424 = vmatprep.subr.mxu0 0.0
            %425 = vmatpush1.msra.mxu0 0.0
            %426 = vmatprep.subr.mxu0 0.0
            %427 = vmatpush1.msra.mxu0 0.0
            %428 = vmatprep.subr.mxu0 0.0
            %429 = vmatpush1.msra.mxu0 0.0
            %430 = vmatprep.subr.mxu0 0.0
            %431 = vmatpush1.msra.mxu0 0.0
            %432 = vmatprep.subr.mxu0 0.0
            %433 = vmatpush1.msra.mxu0 0.0
            %434 = vmatprep.subr.mxu0 0.0
            %435 = vmatpush1.msra.mxu0 0.0
            %436 = vmatprep.subr.mxu0 0.0
            %437 = vmatpush1.msra.mxu0 0.0
            %438 = vmatprep.subr.mxu0 0.0
            %439 = vmatpush1.msra.mxu0 0.0
            %440 = vmatprep.subr.mxu0 0.0
            %441 = vmatpush1.msra.mxu0 0.0
            %442 = vmatprep.subr.mxu0 0.0
            %443 = vmatpush1.msra.mxu0 0.0
            %444 = vmatprep.mubr.f32.mxu0 0.0
            %445 = vmatmul.mubr.f32.gmra.mrb[0].mxu0 %v376
            %v446 = vpop.f32.mrb[0].mxu0
            %v447 = vadd.f32 0.0, %v446
            %v448 = vpop.f32.mrb[0].mxu0
            %449 = vdwg.mxu0
            %v450 = vadd.f32 %v368, %v447
            %v451 = vld [vmem:[%s211 + $0x8] sm:$0xf]
            %s452 = scalar_lea.vmem %s1, 24
            %v453 = vld [vmem:[%s452] sm:$0xff]
            %v455 = vsel %vm217, %v453, 0
            %v458 = vsel %vm221, %v451, 0
            %460 = vmatprep.subr.mxu0 0.0
            %461 = vmatpush1.msra.mxu0 %v458
            %462 = vmatprep.subr.mxu0 0.0
            %463 = vmatpush1.msra.mxu0 0.0
            %464 = vmatprep.subr.mxu0 0.0
            %465 = vmatpush1.msra.mxu0 0.0
            %466 = vmatprep.subr.mxu0 0.0
            %467 = vmatpush1.msra.mxu0 0.0
            %468 = vmatprep.subr.mxu0 0.0
            %469 = vmatpush1.msra.mxu0 0.0
            %470 = vmatprep.subr.mxu0 0.0
            %471 = vmatpush1.msra.mxu0 0.0
            %472 = vmatprep.subr.mxu0 0.0
            %473 = vmatpush1.msra.mxu0 0.0
            %474 = vmatprep.subr.mxu0 0.0
            %475 = vmatpush1.msra.mxu0 0.0
            %476 = vmatprep.subr.mxu0 0.0
            %477 = vmatpush1.msra.mxu0 0.0
            %478 = vmatprep.subr.mxu0 0.0
            %479 = vmatpush1.msra.mxu0 0.0
            %480 = vmatprep.subr.mxu0 0.0
            %481 = vmatpush1.msra.mxu0 0.0
            %482 = vmatprep.subr.mxu0 0.0
            %483 = vmatpush1.msra.mxu0 0.0
            %484 = vmatprep.subr.mxu0 0.0
            %485 = vmatpush1.msra.mxu0 0.0
            %486 = vmatprep.subr.mxu0 0.0
            %487 = vmatpush1.msra.mxu0 0.0
            %488 = vmatprep.subr.mxu0 0.0
            %489 = vmatpush1.msra.mxu0 0.0
            %490 = vmatprep.subr.mxu0 0.0
            %491 = vmatpush1.msra.mxu0 0.0
            %492 = vmatprep.subr.mxu0 0.0
            %493 = vmatpush1.msra.mxu0 0.0
            %494 = vmatprep.subr.mxu0 0.0
            %495 = vmatpush1.msra.mxu0 0.0
            %496 = vmatprep.subr.mxu0 0.0
            %497 = vmatpush1.msra.mxu0 0.0
            %498 = vmatprep.subr.mxu0 0.0
            %499 = vmatpush1.msra.mxu0 0.0
            %500 = vmatprep.subr.mxu0 0.0
            %501 = vmatpush1.msra.mxu0 0.0
            %502 = vmatprep.subr.mxu0 0.0
            %503 = vmatpush1.msra.mxu0 0.0
            %504 = vmatprep.subr.mxu0 0.0
            %505 = vmatpush1.msra.mxu0 0.0
            %506 = vmatprep.subr.mxu0 0.0
            %507 = vmatpush1.msra.mxu0 0.0
            %508 = vmatprep.subr.mxu0 0.0
            %509 = vmatpush1.msra.mxu0 0.0
            %510 = vmatprep.subr.mxu0 0.0
            %511 = vmatpush1.msra.mxu0 0.0
            %512 = vmatprep.subr.mxu0 0.0
            %513 = vmatpush1.msra.mxu0 0.0
            %514 = vmatprep.subr.mxu0 0.0
            %515 = vmatpush1.msra.mxu0 0.0
            %516 = vmatprep.subr.mxu0 0.0
            %517 = vmatpush1.msra.mxu0 0.0
            %518 = vmatprep.subr.mxu0 0.0
            %519 = vmatpush1.msra.mxu0 0.0
            %520 = vmatprep.subr.mxu0 0.0
            %521 = vmatpush1.msra.mxu0 0.0
            %522 = vmatprep.subr.mxu0 0.0
            %523 = vmatpush1.msra.mxu0 0.0
            %524 = vmatprep.mubr.f32.mxu0 0.0
            %525 = vmatmul.mubr.f32.gmra.mrb[0].mxu0 %v455
            %v526 = vpop.f32.mrb[0].mxu0
            %v527 = vadd.f32 0.0, %v526
            %v528 = vpop.f32.mrb[0].mxu0
            %529 = vdwg.mxu0
            %v530 = vadd.f32 %v450, %v527
            %v531 = vld [vmem:[%s211 + $0xc] sm:$0xf]
            %s532 = scalar_lea.vmem %s1, 32
            %v533 = vld [vmem:[%s532] sm:$0xff]
            %v535 = vsel %vm217, %v533, 0
            %v538 = vsel %vm221, %v531, 0
            %540 = vmatprep.subr.mxu0 0.0
            %541 = vmatpush1.msra.mxu0 %v538
            %542 = vmatprep.subr.mxu0 0.0
            %543 = vmatpush1.msra.mxu0 0.0
            %544 = vmatprep.subr.mxu0 0.0
            %545 = vmatpush1.msra.mxu0 0.0
            %546 = vmatprep.subr.mxu0 0.0
            %547 = vmatpush1.msra.mxu0 0.0
            %548 = vmatprep.subr.mxu0 0.0
            %549 = vmatpush1.msra.mxu0 0.0
            %550 = vmatprep.subr.mxu0 0.0
            %551 = vmatpush1.msra.mxu0 0.0
            %552 = vmatprep.subr.mxu0 0.0
            %553 = vmatpush1.msra.mxu0 0.0
            %554 = vmatprep.subr.mxu0 0.0
            %555 = vmatpush1.msra.mxu0 0.0
            %556 = vmatprep.subr.mxu0 0.0
            %557 = vmatpush1.msra.mxu0 0.0
            %558 = vmatprep.subr.mxu0 0.0
            %559 = vmatpush1.msra.mxu0 0.0
            %560 = vmatprep.subr.mxu0 0.0
            %561 = vmatpush1.msra.mxu0 0.0
            %562 = vmatprep.subr.mxu0 0.0
            %563 = vmatpush1.msra.mxu0 0.0
            %564 = vmatprep.subr.mxu0 0.0
            %565 = vmatpush1.msra.mxu0 0.0
            %566 = vmatprep.subr.mxu0 0.0
            %567 = vmatpush1.msra.mxu0 0.0
            %568 = vmatprep.subr.mxu0 0.0
            %569 = vmatpush1.msra.mxu0 0.0
            %570 = vmatprep.subr.mxu0 0.0
            %571 = vmatpush1.msra.mxu0 0.0
            %572 = vmatprep.subr.mxu0 0.0
            %573 = vmatpush1.msra.mxu0 0.0
            %574 = vmatprep.subr.mxu0 0.0
            %575 = vmatpush1.msra.mxu0 0.0
            %576 = vmatprep.subr.mxu0 0.0
            %577 = vmatpush1.msra.mxu0 0.0
            %578 = vmatprep.subr.mxu0 0.0
            %579 = vmatpush1.msra.mxu0 0.0
            %580 = vmatprep.subr.mxu0 0.0
            %581 = vmatpush1.msra.mxu0 0.0
            %582 = vmatprep.subr.mxu0 0.0
            %583 = vmatpush1.msra.mxu0 0.0
            %584 = vmatprep.subr.mxu0 0.0
            %585 = vmatpush1.msra.mxu0 0.0
            %586 = vmatprep.subr.mxu0 0.0
            %587 = vmatpush1.msra.mxu0 0.0
            %588 = vmatprep.subr.mxu0 0.0
            %589 = vmatpush1.msra.mxu0 0.0
            %590 = vmatprep.subr.mxu0 0.0
            %591 = vmatpush1.msra.mxu0 0.0
            %592 = vmatprep.subr.mxu0 0.0
            %593 = vmatpush1.msra.mxu0 0.0
            %594 = vmatprep.subr.mxu0 0.0
            %595 = vmatpush1.msra.mxu0 0.0
            %596 = vmatprep.subr.mxu0 0.0
            %597 = vmatpush1.msra.mxu0 0.0
            %598 = vmatprep.subr.mxu0 0.0
            %599 = vmatpush1.msra.mxu0 0.0
            %600 = vmatprep.subr.mxu0 0.0
            %601 = vmatpush1.msra.mxu0 0.0
            %602 = vmatprep.subr.mxu0 0.0
            %603 = vmatpush1.msra.mxu0 0.0
            %604 = vmatprep.mubr.f32.mxu0 0.0
            %605 = vmatmul.mubr.f32.gmra.mrb[0].mxu0 %v535
            %v606 = vpop.f32.mrb[0].mxu0
            %v607 = vadd.f32 0.0, %v606
            %v608 = vpop.f32.mrb[0].mxu0
            %609 = vdwg.mxu0
            %v610 = vadd.f32 %v530, %v607
            %s611 = scalar_lea.vmem %s1, 40
            %v612 = vld [vmem:[%s611] sm:$0xff]
            %613 = vrot.lane.b32.xlu0 %v451, 127
            %v614 = vpop.permute.xlu0 %613
            %v616 = vsel %vm217, %v612, 0
            %v618 = vsel %vm221, %v614, 0
            %620 = vmatprep.subr.mxu0 0.0
            %621 = vmatpush1.msra.mxu0 %v618
            %622 = vmatprep.subr.mxu0 0.0
            %623 = vmatpush1.msra.mxu0 0.0
            %624 = vmatprep.subr.mxu0 0.0
            %625 = vmatpush1.msra.mxu0 0.0
            %626 = vmatprep.subr.mxu0 0.0
            %627 = vmatpush1.msra.mxu0 0.0
            %628 = vmatprep.subr.mxu0 0.0
            %629 = vmatpush1.msra.mxu0 0.0
            %630 = vmatprep.subr.mxu0 0.0
            %631 = vmatpush1.msra.mxu0 0.0
            %632 = vmatprep.subr.mxu0 0.0
            %633 = vmatpush1.msra.mxu0 0.0
            %634 = vmatprep.subr.mxu0 0.0
            %635 = vmatpush1.msra.mxu0 0.0
            %636 = vmatprep.subr.mxu0 0.0
            %637 = vmatpush1.msra.mxu0 0.0
            %638 = vmatprep.subr.mxu0 0.0
            %639 = vmatpush1.msra.mxu0 0.0
            %640 = vmatprep.subr.mxu0 0.0
            %641 = vmatpush1.msra.mxu0 0.0
            %642 = vmatprep.subr.mxu0 0.0
            %643 = vmatpush1.msra.mxu0 0.0
            %644 = vmatprep.subr.mxu0 0.0
            %645 = vmatpush1.msra.mxu0 0.0
            %646 = vmatprep.subr.mxu0 0.0
            %647 = vmatpush1.msra.mxu0 0.0
            %648 = vmatprep.subr.mxu0 0.0
            %649 = vmatpush1.msra.mxu0 0.0
            %650 = vmatprep.subr.mxu0 0.0
            %651 = vmatpush1.msra.mxu0 0.0
            %652 = vmatprep.subr.mxu0 0.0
            %653 = vmatpush1.msra.mxu0 0.0
            %654 = vmatprep.subr.mxu0 0.0
            %655 = vmatpush1.msra.mxu0 0.0
            %656 = vmatprep.subr.mxu0 0.0
            %657 = vmatpush1.msra.mxu0 0.0
            %658 = vmatprep.subr.mxu0 0.0
            %659 = vmatpush1.msra.mxu0 0.0
            %660 = vmatprep.subr.mxu0 0.0
            %661 = vmatpush1.msra.mxu0 0.0
            %662 = vmatprep.subr.mxu0 0.0
            %663 = vmatpush1.msra.mxu0 0.0
            %664 = vmatprep.subr.mxu0 0.0
            %665 = vmatpush1.msra.mxu0 0.0
            %666 = vmatprep.subr.mxu0 0.0
            %667 = vmatpush1.msra.mxu0 0.0
            %668 = vmatprep.subr.mxu0 0.0
            %669 = vmatpush1.msra.mxu0 0.0
            %670 = vmatprep.subr.mxu0 0.0
            %671 = vmatpush1.msra.mxu0 0.0
            %672 = vmatprep.subr.mxu0 0.0
            %673 = vmatpush1.msra.mxu0 0.0
            %674 = vmatprep.subr.mxu0 0.0
            %675 = vmatpush1.msra.mxu0 0.0
            %676 = vmatprep.subr.mxu0 0.0
            %677 = vmatpush1.msra.mxu0 0.0
            %678 = vmatprep.subr.mxu0 0.0
            %679 = vmatpush1.msra.mxu0 0.0
            %680 = vmatprep.subr.mxu0 0.0
            %681 = vmatpush1.msra.mxu0 0.0
            %682 = vmatprep.subr.mxu0 0.0
            %683 = vmatpush1.msra.mxu0 0.0
            %684 = vmatprep.mubr.f32.mxu0 0.0
            %685 = vmatmul.mubr.f32.gmra.mrb[0].mxu0 %v616
            %v686 = vpop.f32.mrb[0].mxu0
            %v687 = vadd.f32 0.0, %v686
            %v688 = vpop.f32.mrb[0].mxu0
            %689 = vdwg.mxu0
            %v690 = vadd.f32 %v610, %v687
            %s691 = sadd.s32 %s205, 1
            %s692 = smul.u32 %s691, 16
            %s693 = scalar_lea.vmem %s187, %s692
            %v694 = vld [vmem:[%s693] sm:$0xf]
            %s695 = scalar_lea.vmem %s1, 48
            %v696 = vld [vmem:[%s695] sm:$0xff]
            %v698 = vsel %vm217, %v696, 0
            %v701 = vsel %vm221, %v694, 0
            %703 = vmatprep.subr.mxu0 0.0
            %704 = vmatpush1.msra.mxu0 %v701
            %705 = vmatprep.subr.mxu0 0.0
            %706 = vmatpush1.msra.mxu0 0.0
            %707 = vmatprep.subr.mxu0 0.0
            %708 = vmatpush1.msra.mxu0 0.0
            %709 = vmatprep.subr.mxu0 0.0
            %710 = vmatpush1.msra.mxu0 0.0
            %711 = vmatprep.subr.mxu0 0.0
            %712 = vmatpush1.msra.mxu0 0.0
            %713 = vmatprep.subr.mxu0 0.0
            %714 = vmatpush1.msra.mxu0 0.0
            %715 = vmatprep.subr.mxu0 0.0
            %716 = vmatpush1.msra.mxu0 0.0
            %717 = vmatprep.subr.mxu0 0.0
            %718 = vmatpush1.msra.mxu0 0.0
            %719 = vmatprep.subr.mxu0 0.0
            %720 = vmatpush1.msra.mxu0 0.0
            %721 = vmatprep.subr.mxu0 0.0
            %722 = vmatpush1.msra.mxu0 0.0
            %723 = vmatprep.subr.mxu0 0.0
            %724 = vmatpush1.msra.mxu0 0.0
            %725 = vmatprep.subr.mxu0 0.0
            %726 = vmatpush1.msra.mxu0 0.0
            %727 = vmatprep.subr.mxu0 0.0
            %728 = vmatpush1.msra.mxu0 0.0
            %729 = vmatprep.subr.mxu0 0.0
            %730 = vmatpush1.msra.mxu0 0.0
            %731 = vmatprep.subr.mxu0 0.0
            %732 = vmatpush1.msra.mxu0 0.0
            %733 = vmatprep.subr.mxu0 0.0
            %734 = vmatpush1.msra.mxu0 0.0
            %735 = vmatprep.subr.mxu0 0.0
            %736 = vmatpush1.msra.mxu0 0.0
            %737 = vmatprep.subr.mxu0 0.0
            %738 = vmatpush1.msra.mxu0 0.0
            %739 = vmatprep.subr.mxu0 0.0
            %740 = vmatpush1.msra.mxu0 0.0
            %741 = vmatprep.subr.mxu0 0.0
            %742 = vmatpush1.msra.mxu0 0.0
            %743 = vmatprep.subr.mxu0 0.0
            %744 = vmatpush1.msra.mxu0 0.0
            %745 = vmatprep.subr.mxu0 0.0
            %746 = vmatpush1.msra.mxu0 0.0
            %747 = vmatprep.subr.mxu0 0.0
            %748 = vmatpush1.msra.mxu0 0.0
            %749 = vmatprep.subr.mxu0 0.0
            %750 = vmatpush1.msra.mxu0 0.0
            %751 = vmatprep.subr.mxu0 0.0
            %752 = vmatpush1.msra.mxu0 0.0
            %753 = vmatprep.subr.mxu0 0.0
            %754 = vmatpush1.msra.mxu0 0.0
            %755 = vmatprep.subr.mxu0 0.0
            %756 = vmatpush1.msra.mxu0 0.0
            %757 = vmatprep.subr.mxu0 0.0
            %758 = vmatpush1.msra.mxu0 0.0
            %759 = vmatprep.subr.mxu0 0.0
            %760 = vmatpush1.msra.mxu0 0.0
            %761 = vmatprep.subr.mxu0 0.0
            %762 = vmatpush1.msra.mxu0 0.0
            %763 = vmatprep.subr.mxu0 0.0
            %764 = vmatpush1.msra.mxu0 0.0
            %765 = vmatprep.subr.mxu0 0.0
            %766 = vmatpush1.msra.mxu0 0.0
            %767 = vmatprep.mubr.f32.mxu0 0.0
            %768 = vmatmul.mubr.f32.gmra.mrb[0].mxu0 %v698
            %v769 = vpop.f32.mrb[0].mxu0
            %v770 = vadd.f32 0.0, %v769
            %v771 = vpop.f32.mrb[0].mxu0
            %772 = vdwg.mxu0
            %v773 = vadd.f32 %v690, %v770
            %v774 = vld [vmem:[%s693 + $0x4] sm:$0xf]
            %s775 = scalar_lea.vmem %s1, 56
            %v776 = vld [vmem:[%s775] sm:$0xff]
            %v778 = vsel %vm217, %v776, 0
            %v781 = vsel %vm221, %v774, 0
            %783 = vmatprep.subr.mxu0 0.0
            %784 = vmatpush1.msra.mxu0 %v781
            %785 = vmatprep.subr.mxu0 0.0
            %786 = vmatpush1.msra.mxu0 0.0
            %787 = vmatprep.subr.mxu0 0.0
            %788 = vmatpush1.msra.mxu0 0.0
            %789 = vmatprep.subr.mxu0 0.0
            %790 = vmatpush1.msra.mxu0 0.0
            %791 = vmatprep.subr.mxu0 0.0
            %792 = vmatpush1.msra.mxu0 0.0
            %793 = vmatprep.subr.mxu0 0.0
            %794 = vmatpush1.msra.mxu0 0.0
            %795 = vmatprep.subr.mxu0 0.0
            %796 = vmatpush1.msra.mxu0 0.0
            %797 = vmatprep.subr.mxu0 0.0
            %798 = vmatpush1.msra.mxu0 0.0
            %799 = vmatprep.subr.mxu0 0.0
            %800 = vmatpush1.msra.mxu0 0.0
            %801 = vmatprep.subr.mxu0 0.0
            %802 = vmatpush1.msra.mxu0 0.0
            %803 = vmatprep.subr.mxu0 0.0
            %804 = vmatpush1.msra.mxu0 0.0
            %805 = vmatprep.subr.mxu0 0.0
            %806 = vmatpush1.msra.mxu0 0.0
            %807 = vmatprep.subr.mxu0 0.0
            %808 = vmatpush1.msra.mxu0 0.0
            %809 = vmatprep.subr.mxu0 0.0
            %810 = vmatpush1.msra.mxu0 0.0
            %811 = vmatprep.subr.mxu0 0.0
            %812 = vmatpush1.msra.mxu0 0.0
            %813 = vmatprep.subr.mxu0 0.0
            %814 = vmatpush1.msra.mxu0 0.0
            %815 = vmatprep.subr.mxu0 0.0
            %816 = vmatpush1.msra.mxu0 0.0
            %817 = vmatprep.subr.mxu0 0.0
            %818 = vmatpush1.msra.mxu0 0.0
            %819 = vmatprep.subr.mxu0 0.0
            %820 = vmatpush1.msra.mxu0 0.0
            %821 = vmatprep.subr.mxu0 0.0
            %822 = vmatpush1.msra.mxu0 0.0
            %823 = vmatprep.subr.mxu0 0.0
            %824 = vmatpush1.msra.mxu0 0.0
            %825 = vmatprep.subr.mxu0 0.0
            %826 = vmatpush1.msra.mxu0 0.0
            %827 = vmatprep.subr.mxu0 0.0
            %828 = vmatpush1.msra.mxu0 0.0
            %829 = vmatprep.subr.mxu0 0.0
            %830 = vmatpush1.msra.mxu0 0.0
            %831 = vmatprep.subr.mxu0 0.0
            %832 = vmatpush1.msra.mxu0 0.0
            %833 = vmatprep.subr.mxu0 0.0
            %834 = vmatpush1.msra.mxu0 0.0
            %835 = vmatprep.subr.mxu0 0.0
            %836 = vmatpush1.msra.mxu0 0.0
            %837 = vmatprep.subr.mxu0 0.0
            %838 = vmatpush1.msra.mxu0 0.0
            %839 = vmatprep.subr.mxu0 0.0
            %840 = vmatpush1.msra.mxu0 0.0
            %841 = vmatprep.subr.mxu0 0.0
            %842 = vmatpush1.msra.mxu0 0.0
            %843 = vmatprep.subr.mxu0 0.0
            %844 = vmatpush1.msra.mxu0 0.0
            %845 = vmatprep.subr.mxu0 0.0
            %846 = vmatpush1.msra.mxu0 0.0
            %847 = vmatprep.mubr.f32.mxu0 0.0
            %848 = vmatmul.mubr.f32.gmra.mrb[0].mxu0 %v778
            %v849 = vpop.f32.mrb[0].mxu0
            %v850 = vadd.f32 0.0, %v849
            %v851 = vpop.f32.mrb[0].mxu0
            %852 = vdwg.mxu0
            %v853 = vadd.f32 %v773, %v850
            %s854 = scalar_lea.vmem %s1, 64
            %v855 = vld [vmem:[%s854] sm:$0xff]
            %856 = vrot.lane.b32.xlu0 %v694, 127
            %v857 = vpop.permute.xlu0 %856
            %v859 = vsel %vm217, %v855, 0
            %v861 = vsel %vm221, %v857, 0
            %863 = vmatprep.subr.mxu0 0.0
            %864 = vmatpush1.msra.mxu0 %v861
            %865 = vmatprep.subr.mxu0 0.0
            %866 = vmatpush1.msra.mxu0 0.0
            %867 = vmatprep.subr.mxu0 0.0
            %868 = vmatpush1.msra.mxu0 0.0
            %869 = vmatprep.subr.mxu0 0.0
            %870 = vmatpush1.msra.mxu0 0.0
            %871 = vmatprep.subr.mxu0 0.0
            %872 = vmatpush1.msra.mxu0 0.0
            %873 = vmatprep.subr.mxu0 0.0
            %874 = vmatpush1.msra.mxu0 0.0
            %875 = vmatprep.subr.mxu0 0.0
            %876 = vmatpush1.msra.mxu0 0.0
            %877 = vmatprep.subr.mxu0 0.0
            %878 = vmatpush1.msra.mxu0 0.0
            %879 = vmatprep.subr.mxu0 0.0
            %880 = vmatpush1.msra.mxu0 0.0
            %881 = vmatprep.subr.mxu0 0.0
            %882 = vmatpush1.msra.mxu0 0.0
            %883 = vmatprep.subr.mxu0 0.0
            %884 = vmatpush1.msra.mxu0 0.0
            %885 = vmatprep.subr.mxu0 0.0
            %886 = vmatpush1.msra.mxu0 0.0
            %887 = vmatprep.subr.mxu0 0.0
            %888 = vmatpush1.msra.mxu0 0.0
            %889 = vmatprep.subr.mxu0 0.0
            %890 = vmatpush1.msra.mxu0 0.0
            %891 = vmatprep.subr.mxu0 0.0
            %892 = vmatpush1.msra.mxu0 0.0
            %893 = vmatprep.subr.mxu0 0.0
            %894 = vmatpush1.msra.mxu0 0.0
            %895 = vmatprep.subr.mxu0 0.0
            %896 = vmatpush1.msra.mxu0 0.0
            %897 = vmatprep.subr.mxu0 0.0
            %898 = vmatpush1.msra.mxu0 0.0
            %899 = vmatprep.subr.mxu0 0.0
            %900 = vmatpush1.msra.mxu0 0.0
            %901 = vmatprep.subr.mxu0 0.0
            %902 = vmatpush1.msra.mxu0 0.0
            %903 = vmatprep.subr.mxu0 0.0
            %904 = vmatpush1.msra.mxu0 0.0
            %905 = vmatprep.subr.mxu0 0.0
            %906 = vmatpush1.msra.mxu0 0.0
            %907 = vmatprep.subr.mxu0 0.0
            %908 = vmatpush1.msra.mxu0 0.0
            %909 = vmatprep.subr.mxu0 0.0
            %910 = vmatpush1.msra.mxu0 0.0
            %911 = vmatprep.subr.mxu0 0.0
            %912 = vmatpush1.msra.mxu0 0.0
            %913 = vmatprep.subr.mxu0 0.0
            %914 = vmatpush1.msra.mxu0 0.0
            %915 = vmatprep.subr.mxu0 0.0
            %916 = vmatpush1.msra.mxu0 0.0
            %917 = vmatprep.subr.mxu0 0.0
            %918 = vmatpush1.msra.mxu0 0.0
            %919 = vmatprep.subr.mxu0 0.0
            %920 = vmatpush1.msra.mxu0 0.0
            %921 = vmatprep.subr.mxu0 0.0
            %922 = vmatpush1.msra.mxu0 0.0
            %923 = vmatprep.subr.mxu0 0.0
            %924 = vmatpush1.msra.mxu0 0.0
            %925 = vmatprep.subr.mxu0 0.0
            %926 = vmatpush1.msra.mxu0 0.0
            %927 = vmatprep.mubr.f32.mxu0 0.0
            %928 = vmatmul.mubr.f32.gmra.mrb[0].mxu0 %v859
            %v929 = vpop.f32.mrb[0].mxu0
            %v930 = vadd.f32 0.0, %v929
            %v931 = vpop.f32.mrb[0].mxu0
            %932 = vdwg.mxu0
            %v933 = vadd.f32 %v853, %v930
            %s934 = smul.u32 %s21, 8
            %s935 = sadd.s32 %s934, %s205
            %v937 = vcombine.high %v933, %v933
            %v939 = vunpack.c.l.s4 1966171168
            %v940 = vunpack.c.0.s8 %v939
            %v941 = vlaneseq
            %v942 = vshrl.u32 %v941, 7
            %v943 = vsub.s32 %v940, %v942
            %v944 = vrot.slane %v933, %v943
            %v946 = vunpack.c.l.s4 1966171168
            %v947 = vunpack.c.0.s8 %v946
            %v948 = vlaneseq
            %v949 = vshrl.u32 %v948, 7
            %v950 = vsub.s32 %v947, %v949
            %v951 = vrot.slane %v937, %v950
            %v952 = vcombine.high %v944, %v944
            %v953 = vcombine.high %v951, %v951
            %v955 = vunpack.c.l.s4 1966171168
            %v956 = vunpack.c.0.s8 %v955
            %v957 = vlaneseq
            %v958 = vshrl.u32 %v957, 7
            %v959 = vsub.s32 %v956, %v958
            %v960 = vrot.slane %v944, %v959
            %v962 = vunpack.c.l.s4 1966171168
            %v963 = vunpack.c.0.s8 %v962
            %v964 = vlaneseq
            %v965 = vshrl.u32 %v964, 7
            %v966 = vsub.s32 %v963, %v965
            %v967 = vrot.slane %v951, %v966
            %v969 = vunpack.c.l.s4 1966171168
            %v970 = vunpack.c.0.s8 %v969
            %v971 = vlaneseq
            %v972 = vshrl.u32 %v971, 7
            %v973 = vsub.s32 %v970, %v972
            %v974 = vrot.slane %v952, %v973
            %v976 = vunpack.c.l.s4 1966171168
            %v977 = vunpack.c.0.s8 %v976
            %v978 = vlaneseq
            %v979 = vshrl.u32 %v978, 7
            %v980 = vsub.s32 %v977, %v979
            %v981 = vrot.slane %v953, %v980
            %v982 = vcombine.high %v960, %v960
            %v983 = vcombine.high %v967, %v967
            %v984 = vcombine.high %v974, %v974
            %v985 = vcombine.high %v981, %v981
            %s994 = scalar_lea.vmem [#allocation2], %s935
            %vm995 = vcmask 57344
            %996 = vst.msk [vmem:[%s994] sm:$0x1] %vm995, %v960
            %997 = vst.msk [vmem:[%s994 + $0x8] sm:$0x1] %vm995, %v974
            %998 = vst.msk [vmem:[%s994 + $0x10] sm:$0x1] %vm995, %v982
            %999 = vst.msk [vmem:[%s994 + $0x18] sm:$0x1] %vm995, %v984
            %1000 = vst.msk [vmem:[%s994 + $0x20] sm:$0x1] %vm995, %v967
            %1001 = vst.msk [vmem:[%s994 + $0x28] sm:$0x1] %vm995, %v981
            %1002 = vst.msk [vmem:[%s994 + $0x30] sm:$0x1] %vm995, %v983
            %1003 = vst.msk [vmem:[%s994 + $0x38] sm:$0x1] %vm995, %v985
            %v1004 = vld [vmem:[#allocation3] sm:$0xff]
            %vm1005 = vcmask 64512
            %v1006 = vsel %vm1005, %v933, 0.0
            %1007 = vadd.xlane.f32.xlu0 %v1006
            %v1008 = vpop.xlane.xlu0 %1007
            %v1009 = vadd.f32 %v1004, %v1008
            %vm1010 = vcmask 7168
            %1011 = vst.msk [vmem:[#allocation3] sm:$0xff] %vm1010, %v1009
            %s1012 = scalar_lea.vmem [#allocation3], 8
            %v1013 = vld [vmem:[%s1012] sm:$0xff]
            %v1014 = vmul.f32 %v933, %v933
            %v1015 = vsel %vm1005, %v1014, 0.0
            %1016 = vadd.xlane.f32.xlu0 %v1015
            %v1017 = vpop.xlane.xlu0 %1016
            %v1018 = vadd.f32 %v1013, %v1017
            %1019 = vst.msk [vmem:[%s1012] sm:$0xff] %vm1010, %v1018
          $region41: #{tpu_custom_call.1} parent=31 // loop_footer
            %s209 = sadd.s32 1, %s205
          $region42: #{tpu_custom_call.1} parent=31 // loop_footer_branch
            %204 = sbr.rel target = $region38
          $region43: #{tpu_custom_call.1} parent=31 // loop_exit
            _
        $region32: #{tpu_custom_call.1} parent=27 // pred_fallthru
          _
        %p1020 = scmp.ge.s32.totalorder %s21, 1
        // Predicated region
        $region44: #{tpu_custom_call.1} parent=27 // pred_check
          %p1021 = pneg %p1020
        $region45: #{tpu_custom_call.1} parent=27 // pred_check_branch
          %1023 = sbr.rel (%p1021) target = $region47
        $region46: #{tpu_custom_call.1} parent=27 // pred_region
          %v1024 = vld [vmem:[#allocation3] sm:$0xff]
          %v1025 = vmul.f32 %v1024, 0.015625
          %s1026 = scalar_lea.vmem [#allocation3], 8
          %v1027 = vld [vmem:[%s1026] sm:$0xff]
          %v1028 = vmul.f32 %v1027, 0.015625
          %v1029 = vmul.f32 %v1025, %v1025
          %v1030 = vsub.f32 %v1028, %v1029
          %v1031 = vadd.f32 %v1030, 1e-05
          %v1032 = vrsqrt.pop %v1031
          %s1033 = ssub.s32 %s21, 1
          %s1034 = smul.u32 %s1033, 8
          %s1035 = scalar_lea.vmem [#allocation2], %s1034
          %v1036 = vld [vmem:[%s1035] sm:$0xff]
          %v1037 = vld [vmem:[%s1035 + $0x8] sm:$0xff]
          %v1038 = vld [vmem:[%s1035 + $0x10] sm:$0xff]
          %v1039 = vld [vmem:[%s1035 + $0x18] sm:$0xff]
          %v1040 = vld [vmem:[%s1035 + $0x20] sm:$0xff]
          %v1041 = vld [vmem:[%s1035 + $0x28] sm:$0xff]
          %v1042 = vld [vmem:[%s1035 + $0x30] sm:$0xff]
          %v1043 = vld [vmem:[%s1035 + $0x38] sm:$0xff]
          %v1045 = vcombine.high %v1025, %v1025
          %v1047 = vunpack.c.l.s4 1966171168
          %v1048 = vunpack.c.0.s8 %v1047
          %v1049 = vlaneseq
          %v1050 = vshrl.u32 %v1049, 7
          %v1051 = vsub.s32 %v1048, %v1050
          %v1052 = vrot.slane %v1025, %v1051
          %v1054 = vunpack.c.l.s4 1966171168
          %v1055 = vunpack.c.0.s8 %v1054
          %v1056 = vlaneseq
          %v1057 = vshrl.u32 %v1056, 7
          %v1058 = vsub.s32 %v1055, %v1057
          %v1059 = vrot.slane %v1045, %v1058
          %v1060 = vcombine.high %v1052, %v1052
          %v1061 = vcombine.high %v1059, %v1059
          %v1063 = vunpack.c.l.s4 1966171168
          %v1064 = vunpack.c.0.s8 %v1063
          %v1065 = vlaneseq
          %v1066 = vshrl.u32 %v1065, 7
          %v1067 = vsub.s32 %v1064, %v1066
          %v1068 = vrot.slane %v1052, %v1067
          %v1070 = vunpack.c.l.s4 1966171168
          %v1071 = vunpack.c.0.s8 %v1070
          %v1072 = vlaneseq
          %v1073 = vshrl.u32 %v1072, 7
          %v1074 = vsub.s32 %v1071, %v1073
          %v1075 = vrot.slane %v1059, %v1074
          %v1077 = vunpack.c.l.s4 1966171168
          %v1078 = vunpack.c.0.s8 %v1077
          %v1079 = vlaneseq
          %v1080 = vshrl.u32 %v1079, 7
          %v1081 = vsub.s32 %v1078, %v1080
          %v1082 = vrot.slane %v1060, %v1081
          %v1084 = vunpack.c.l.s4 1966171168
          %v1085 = vunpack.c.0.s8 %v1084
          %v1086 = vlaneseq
          %v1087 = vshrl.u32 %v1086, 7
          %v1088 = vsub.s32 %v1085, %v1087
          %v1089 = vrot.slane %v1061, %v1088
          %v1090 = vcombine.high %v1068, %v1068
          %v1091 = vcombine.high %v1075, %v1075
          %v1092 = vcombine.high %v1082, %v1082
          %v1093 = vcombine.high %v1089, %v1089
          %v1094 = vlaneseq
          %v1095 = vshrl.u32 %v1094, 7
          %v1096 = vsub.s32 0, %v1095
          %v1097 = vrot.slane %v1068, %v1096
          %v1098 = vlaneseq
          %v1099 = vshrl.u32 %v1098, 7
          %v1100 = vsub.s32 0, %v1099
          %v1101 = vrot.slane %v1082, %v1100
          %v1102 = vlaneseq
          %v1103 = vshrl.u32 %v1102, 7
          %v1104 = vsub.s32 0, %v1103
          %v1105 = vrot.slane %v1090, %v1104
          %v1106 = vlaneseq
          %v1107 = vshrl.u32 %v1106, 7
          %v1108 = vsub.s32 0, %v1107
          %v1109 = vrot.slane %v1092, %v1108
          %v1110 = vlaneseq
          %v1111 = vshrl.u32 %v1110, 7
          %v1112 = vsub.s32 0, %v1111
          %v1113 = vrot.slane %v1075, %v1112
          %v1114 = vlaneseq
          %v1115 = vshrl.u32 %v1114, 7
          %v1116 = vsub.s32 0, %v1115
          %v1117 = vrot.slane %v1089, %v1116
          %v1118 = vlaneseq
          %v1119 = vshrl.u32 %v1118, 7
          %v1120 = vsub.s32 0, %v1119
          %v1121 = vrot.slane %v1091, %v1120
          %v1122 = vlaneseq
          %v1123 = vshrl.u32 %v1122, 7
          %v1124 = vsub.s32 0, %v1123
          %v1125 = vrot.slane %v1093, %v1124
          %1126 = vset.pattern.permute.xlu0 0
          %1127 = vperm.xlu0 %1126, %v1097
          %v1128 = vpop.permute.xlu0 %1127
          %1130 = vset.pattern.permute.xlu0 0
          %1131 = vperm.xlu0 %1130, %v1101
          %v1132 = vpop.permute.xlu0 %1131
          %1134 = vset.pattern.permute.xlu0 0
          %1135 = vperm.xlu0 %1134, %v1105
          %v1136 = vpop.permute.xlu0 %1135
          %1138 = vset.pattern.permute.xlu0 0
          %1139 = vperm.xlu0 %1138, %v1109
          %v1140 = vpop.permute.xlu0 %1139
          %1142 = vset.pattern.permute.xlu0 0
          %1143 = vperm.xlu0 %1142, %v1113
          %v1144 = vpop.permute.xlu0 %1143
          %1146 = vset.pattern.permute.xlu0 0
          %1147 = vperm.xlu0 %1146, %v1117
          %v1148 = vpop.permute.xlu0 %1147
          %1150 = vset.pattern.permute.xlu0 0
          %1151 = vperm.xlu0 %1150, %v1121
          %v1152 = vpop.permute.xlu0 %1151
          %1154 = vset.pattern.permute.xlu0 0
          %1155 = vperm.xlu0 %1154, %v1125
          %v1156 = vpop.permute.xlu0 %1155
          %v1158 = vsub.f32 %v1036, %v1128
          %v1159 = vsub.f32 %v1037, %v1132
          %v1160 = vsub.f32 %v1038, %v1136
          %v1161 = vsub.f32 %v1039, %v1140
          %v1162 = vsub.f32 %v1040, %v1144
          %v1163 = vsub.f32 %v1041, %v1148
          %v1164 = vsub.f32 %v1042, %v1152
          %v1165 = vsub.f32 %v1043, %v1156
          %v1167 = vcombine.high %v1032, %v1032
          %v1169 = vunpack.c.l.s4 1966171168
          %v1170 = vunpack.c.0.s8 %v1169
          %v1171 = vlaneseq
          %v1172 = vshrl.u32 %v1171, 7
          %v1173 = vsub.s32 %v1170, %v1172
          %v1174 = vrot.slane %v1032, %v1173
          %v1176 = vunpack.c.l.s4 1966171168
          %v1177 = vunpack.c.0.s8 %v1176
          %v1178 = vlaneseq
          %v1179 = vshrl.u32 %v1178, 7
          %v1180 = vsub.s32 %v1177, %v1179
          %v1181 = vrot.slane %v1167, %v1180
          %v1182 = vcombine.high %v1174, %v1174
          %v1183 = vcombine.high %v1181, %v1181
          %v1185 = vunpack.c.l.s4 1966171168
          %v1186 = vunpack.c.0.s8 %v1185
          %v1187 = vlaneseq
          %v1188 = vshrl.u32 %v1187, 7
          %v1189 = vsub.s32 %v1186, %v1188
          %v1190 = vrot.slane %v1174, %v1189
          %v1192 = vunpack.c.l.s4 1966171168
          %v1193 = vunpack.c.0.s8 %v1192
          %v1194 = vlaneseq
          %v1195 = vshrl.u32 %v1194, 7
          %v1196 = vsub.s32 %v1193, %v1195
          %v1197 = vrot.slane %v1181, %v1196
          %v1199 = vunpack.c.l.s4 1966171168
          %v1200 = vunpack.c.0.s8 %v1199
          %v1201 = vlaneseq
          %v1202 = vshrl.u32 %v1201, 7
          %v1203 = vsub.s32 %v1200, %v1202
          %v1204 = vrot.slane %v1182, %v1203
          %v1206 = vunpack.c.l.s4 1966171168
          %v1207 = vunpack.c.0.s8 %v1206
          %v1208 = vlaneseq
          %v1209 = vshrl.u32 %v1208, 7
          %v1210 = vsub.s32 %v1207, %v1209
          %v1211 = vrot.slane %v1183, %v1210
          %v1212 = vcombine.high %v1190, %v1190
          %v1213 = vcombine.high %v1197, %v1197
          %v1214 = vcombine.high %v1204, %v1204
          %v1215 = vcombine.high %v1211, %v1211
          %v1216 = vlaneseq
          %v1217 = vshrl.u32 %v1216, 7
          %v1218 = vsub.s32 0, %v1217
          %v1219 = vrot.slane %v1190, %v1218
          %v1220 = vlaneseq
          %v1221 = vshrl.u32 %v1220, 7
          %v1222 = vsub.s32 0, %v1221
          %v1223 = vrot.slane %v1204, %v1222
          %v1224 = vlaneseq
          %v1225 = vshrl.u32 %v1224, 7
          %v1226 = vsub.s32 0, %v1225
          %v1227 = vrot.slane %v1212, %v1226
          %v1228 = vlaneseq
          %v1229 = vshrl.u32 %v1228, 7
          %v1230 = vsub.s32 0, %v1229
          %v1231 = vrot.slane %v1214, %v1230
          %v1232 = vlaneseq
          %v1233 = vshrl.u32 %v1232, 7
          %v1234 = vsub.s32 0, %v1233
          %v1235 = vrot.slane %v1197, %v1234
          %v1236 = vlaneseq
          %v1237 = vshrl.u32 %v1236, 7
          %v1238 = vsub.s32 0, %v1237
          %v1239 = vrot.slane %v1211, %v1238
          %v1240 = vlaneseq
          %v1241 = vshrl.u32 %v1240, 7
          %v1242 = vsub.s32 0, %v1241
          %v1243 = vrot.slane %v1213, %v1242
          %v1244 = vlaneseq
          %v1245 = vshrl.u32 %v1244, 7
          %v1246 = vsub.s32 0, %v1245
          %v1247 = vrot.slane %v1215, %v1246
          %1248 = vset.pattern.permute.xlu0 0
          %1249 = vperm.xlu0 %1248, %v1219
          %v1250 = vpop.permute.xlu0 %1249
          %1252 = vset.pattern.permute.xlu0 0
          %1253 = vperm.xlu0 %1252, %v1223
          %v1254 = vpop.permute.xlu0 %1253
          %1256 = vset.pattern.permute.xlu0 0
          %1257 = vperm.xlu0 %1256, %v1227
          %v1258 = vpop.permute.xlu0 %1257
          %1260 = vset.pattern.permute.xlu0 0
          %1261 = vperm.xlu0 %1260, %v1231
          %v1262 = vpop.permute.xlu0 %1261
          %1264 = vset.pattern.permute.xlu0 0
          %1265 = vperm.xlu0 %1264, %v1235
          %v1266 = vpop.permute.xlu0 %1265
          %1268 = vset.pattern.permute.xlu0 0
          %1269 = vperm.xlu0 %1268, %v1239
          %v1270 = vpop.permute.xlu0 %1269
          %1272 = vset.pattern.permute.xlu0 0
          %1273 = vperm.xlu0 %1272, %v1243
          %v1274 = vpop.permute.xlu0 %1273
          %1276 = vset.pattern.permute.xlu0 0
          %1277 = vperm.xlu0 %1276, %v1247
          %v1278 = vpop.permute.xlu0 %1277
          %v1280 = vmul.f32 %v1158, %v1250
          %v1281 = vmul.f32 %v1159, %v1254
          %v1282 = vmul.f32 %v1160, %v1258
          %v1283 = vmul.f32 %v1161, %v1262
          %v1284 = vmul.f32 %v1162, %v1266
          %v1285 = vmul.f32 %v1163, %v1270
          %v1286 = vmul.f32 %v1164, %v1274
          %v1287 = vmul.f32 %v1165, %v1278
          %v1288 = vmax.f32 %v1280, 0.0
          %v1289 = vmax.f32 %v1281, 0.0
          %v1290 = vmax.f32 %v1282, 0.0
          %v1291 = vmax.f32 %v1283, 0.0
          %v1292 = vmax.f32 %v1284, 0.0
          %v1293 = vmax.f32 %v1285, 0.0
          %v1294 = vmax.f32 %v1286, 0.0
          %v1295 = vmax.f32 %v1287, 0.0
          %vm1296 = vcmask 64512
          %1297 = vst.msk [vmem:[%s176] sm:$0xff] %vm1296, %v1288
          %1298 = vst.msk [vmem:[%s176 + $0x8] sm:$0xff] %vm1296, %v1289
          %1299 = vst.msk [vmem:[%s176 + $0x10] sm:$0xff] %vm1296, %v1290
          %1300 = vst.msk [vmem:[%s176 + $0x18] sm:$0xff] %vm1296, %v1291
          %1301 = vst.msk [vmem:[%s176 + $0x20] sm:$0xff] %vm1296, %v1292
          %1302 = vst.msk [vmem:[%s176 + $0x28] sm:$0xff] %vm1296, %v1293
          %1303 = vst.msk [vmem:[%s176 + $0x30] sm:$0xff] %vm1296, %v1294
          %1304 = vst.msk [vmem:[%s176 + $0x38] sm:$0xff] %vm1296, %v1295
        $region47: #{tpu_custom_call.1} parent=27 // pred_fallthru
          _
        %s1305 = sand.u32 %s97, 1
        %s1306 = scalar_lea.sflag [#allocation5], %s1305
        %s1307 = sand.u32 %s97, 1
        %s1308 = smul.addr %s1307, 64
        %s1309 = scalar_lea.vmem [#allocation4], %s1308
        // Predicated region
        $region48: #{tpu_custom_call.1} parent=27 // pred_check
          %p1310 = pneg %p107
        $region49: #{tpu_custom_call.1} parent=27 // pred_check_branch
          %1312 = sbr.rel (%p1310) target = $region51
        $region50: #{tpu_custom_call.1} parent=27 // pred_region
          %s1313 = ssub.s32 %s21, 1
          %p1314 = scmp.gt.s32.totalorder %s1313, 0
          %s1315 = scalar_select %p1314, %s1313, 0
          %s1317 = ssub.s32 1024, 1024
          %1318 = vsyncadd %s1306, %s1317
          %s1319 = smul.addr %s20, 8
          %s1320 = sadd.s32 %s1315, %s1319
          %s1321 = smul.addr %s1320, 128
          %s1322 = scalar_lea.hbm %s2, %s1321
          %s1323 = sshll.u32 %s1309, 4
          %s1324 = int_to_ptr.vmem [resolvable:$true] %s1323
          %1329 = dma.vmem_to_hbm [thread:$0]  %s1324, 1024, %s1322, %s1306, 128, 128, 8
        $region51: #{tpu_custom_call.1} parent=27 // pred_fallthru
          _
      $region28: #{tpu_custom_call.1} parent=5 // pred_fallthru
        _
      %p1330 = scmp.le.s32.totalorder 2, %s11
      // Predicated region
      $region52: #{tpu_custom_call.1} parent=5 // pred_check
        %p1331 = pneg %p1330
      $region53: #{tpu_custom_call.1} parent=5 // pred_check_branch
        %1333 = sbr.rel (%p1331) target = $region55
      $region54: #{tpu_custom_call.1} parent=5 // pred_region
        %s1334 = ssub.s32 %s11, 2
        // Predicated region
        $region56: #{tpu_custom_call.1} parent=54 // pred_check
          %p1335 = pneg %p113
        $region57: #{tpu_custom_call.1} parent=54 // pred_check_branch
          %1337 = sbr.rel (%p1335) target = $region59
        $region58: #{tpu_custom_call.1} parent=54 // pred_region
          %s1338 = sand.u32 %s98, 1
          %s1339 = scalar_lea.sflag [#allocation5], %s1338
          %s1340 = sand.u32 %s98, 1
          %s1341 = smul.addr %s1340, 64
          %s1342 = scalar_lea.vmem [#allocation4], %s1341
          %1343 = dma.done %s1339, 1024
        $region59: #{tpu_custom_call.1} parent=54 // pred_fallthru
          _
      $region55: #{tpu_custom_call.1} parent=5 // pred_fallthru
        _
    $region6: #{tpu_custom_call.1} parent=1 // loop_footer
      %s15 = sadd.s32 1, %s11
    $region7: #{tpu_custom_call.1} parent=1 // loop_footer_branch
      %10 = sbr.rel target = $region3
    $region8: #{tpu_custom_call.1} parent=1 // loop_exit
      _
    %1344 = vsyncpa [#allocation5], 1
    %s1345 = scalar_lea.sflag [#allocation5], 1
    %1346 = vsyncpa %s1345, 1

</llo_original>
